<compile_context>
chip_gen: v6e
topology: v6e:2x2x1
jax: 0.10.0
libtpu: 0.0.40
codegen_flags: <defaults>
</compile_context>

<pallas_src>
import math

import numpy as np
import jax
import jax.numpy as jnp
from jax.experimental import pallas as pl
from jax.experimental.pallas import tpu as pltpu


def _pos_embed_kernel(emb_ref, inv_dim_ref, phase_ref, out_ref):
    # emb_ref    : (1, 1, H, W)  y_embed (half 0) or x_embed (half 1) for this batch
    # inv_dim_ref: (tf, 1)       precomputed 1/dim_t for this channel tile
    # phase_ref  : (tf, 1)       0.0 for even channels, pi/2 for odd (sin(x+pi/2)=cos(x))
    # out_ref    : (1, tf, H, W) NCHW output tile
    emb = emb_ref[0, 0]                         # [H, W]
    inv_dim = inv_dim_ref[...][:, :, None]      # [tf, 1, 1]
    phase = phase_ref[...][:, :, None]          # [tf, 1, 1]
    out_ref[0] = jnp.sin(emb[None, :, :] * inv_dim + phase)


def _pick_channel_tile(num_pos_feats, H, W, max_bytes=2 * 1024 * 1024):
    """Largest channel tile tf that divides F, is a multiple of 8 (BlockSpec rule)
    and keeps the output block comfortably inside VMEM (double-buffered, v7x ok)."""
    tf = num_pos_feats
    if num_pos_feats % 8 != 0:
        return tf  # fall back to the full half (block dim == full array dim is legal)
    while tf > 8 and tf % 16 == 0 and tf * H * W * 4 > max_bytes:
        tf //= 2
    return tf


def position_embedding_sine(mask, *, num_pos_feats=64, temperature=10000,
                            normalize=False, scale=None):
    """mask: bool [B, H, W]. Returns float32 [B, 2*num_pos_feats, H, W] (NCHW)."""
    if scale is not None and normalize is False:
        raise ValueError('normalize should be True if scale is passed')
    if scale is None:
        scale = 2 * math.pi

    B, H, W = mask.shape
    F = num_pos_feats

    # ---- tiny prep (B*H*W floats), hoisted out of the kernel ----
    not_mask = (~mask).astype(jnp.float32)
    y_embed = jnp.cumsum(not_mask, axis=1)
    x_embed = jnp.cumsum(not_mask, axis=2)
    if normalize:
        eps = 1e-6
        y_embed = y_embed / (y_embed[:, -1:, :] + eps) * scale
        x_embed = x_embed / (x_embed[:, :, -1:] + eps) * scale
    embeds = jnp.stack([y_embed, x_embed], axis=1)       # [B, 2, H, W]

    # ---- static per-channel constants, computed with numpy at trace time ----
    # dim_t[i] = temperature ** (2*(i//2)/F); note dim_t[2i] == dim_t[2i+1], so
    # channel i uses inv_dim_t[i] with phase 0 (sin) for even i, pi/2 (cos) for odd i.
    idx = np.arange(F, dtype=np.float32)
    dim_t = np.float32(temperature) ** (2.0 * np.floor(idx / 2.0) / np.float32(F))
    inv_dim_t = (1.0 / dim_t).astype(np.float32).reshape(F, 1)
    phase = ((idx % 2).astype(np.float32) * np.float32(np.pi / 2.0)).reshape(F, 1)

    tf = _pick_channel_tile(F, H, W)
    n_ct = F // tf                                       # channel tiles per half

    out = pl.pallas_call(
        _pos_embed_kernel,
        out_shape=jax.ShapeDtypeStruct((B, 2 * F, H, W), jnp.float32),
        grid_spec=pltpu.PrefetchScalarGridSpec(
            num_scalar_prefetch=0,
            grid=(B, 2, n_ct),                # batch, (y | x) half, channel tile
            in_specs=[
                pl.BlockSpec((1, 1, H, W), lambda b, s, c: (b, s, 0, 0)),
                pl.BlockSpec((tf, 1), lambda b, s, c: (c, 0)),
                pl.BlockSpec((tf, 1), lambda b, s, c: (c, 0)),
            ],
            out_specs=pl.BlockSpec((1, tf, H, W),
                                   lambda b, s, c: (b, s * n_ct + c, 0, 0)),
        ),
        compiler_params=pltpu.CompilerParams(
            dimension_semantics=("parallel", "parallel", "parallel")),
    )(embeds, jnp.asarray(inv_dim_t), jnp.asarray(phase))

    return out                                           # already NCHW


def _reference(mask, *, num_pos_feats, temperature, normalize, scale):
    """Pure-JAX reference mirroring the PyTorch forward exactly."""
    if scale is None:
        scale = 2 * math.pi
    not_mask = (~mask).astype(jnp.float32)
    y_embed = jnp.cumsum(not_mask, axis=1)
    x_embed = jnp.cumsum(not_mask, axis=2)
    if normalize:
        eps = 1e-6
        y_embed = y_embed / (y_embed[:, -1:, :] + eps) * scale
        x_embed = x_embed / (x_embed[:, :, -1:] + eps) * scale
    dim_t = jnp.arange(num_pos_feats, dtype=jnp.float32)
    dim_t = temperature ** (2 * jnp.floor(dim_t / 2) / num_pos_feats)
    pos_x = x_embed[:, :, :, None] / dim_t
    pos_y = y_embed[:, :, :, None] / dim_t
    pos_x = jnp.stack((jnp.sin(pos_x[..., 0::2]), jnp.cos(pos_x[..., 1::2])),
                      axis=4).reshape(*pos_x.shape[:3], -1)
    pos_y = jnp.stack((jnp.sin(pos_y[..., 0::2]), jnp.cos(pos_y[..., 1::2])),
                      axis=4).reshape(*pos_y.shape[:3], -1)
    pos = jnp.concatenate((pos_y, pos_x), axis=3)
    return jnp.transpose(pos, (0, 3, 1, 2))


if __name__ == "__main__":
    key = jax.random.PRNGKey(0)
    B, H, W = 2, 16, 16
    num_pos_feats = 8            # output has 2*num_pos_feats = 16 channels

    # x would be the image features [B, C, H, W]; only its H/W (via mask) matter here.
    mask = jax.random.bernoulli(key, p=0.2, shape=(B, H, W))   # bool mask

    for normalize, scale in ((False, None), (True, 2 * math.pi)):
        out = position_embedding_sine(
            mask, num_pos_feats=num_pos_feats, temperature=10000,
            normalize=normalize, scale=scale)
        out = jax.block_until_ready(out)
        ref = _reference(mask, num_pos_feats=num_pos_feats, temperature=10000,
                         normalize=normalize, scale=scale)
        assert out.shape == (B, 2 * num_pos_feats, H, W)
        assert jnp.allclose(out, ref, atol=1e-4, rtol=1e-4), (
            f"mismatch (normalize={normalize})")

    print("KERNEL_OK")
</pallas_src>

<mosaic_0001>
module attributes {stable_mosaic.version = 11 : i64} {
  func.func @_pos_embed_kernel(%arg0: i32, %arg1: i32, %arg2: i32, %arg3: memref<1x1x16x16xf32, #tpu.memory_space<vmem>>, %arg4: memref<8x1xf32, #tpu.memory_space<vmem>>, %arg5: memref<8x1xf32, #tpu.memory_space<vmem>>, %arg6: memref<1x8x16x16xf32, #tpu.memory_space<vmem>>) attributes {dimension_semantics = [#tpu.dimension_semantics<parallel>, #tpu.dimension_semantics<parallel>, #tpu.dimension_semantics<parallel>], iteration_bounds = array<i64: 2, 2, 1>, scalar_prefetch = 0 : i64, scratch_operands = 0 : i64, tpu.core_type = #tpu.core_type<tc>, window_params = [{transform_indices = @transform_0, window_bounds = array<i64: 1, 1, 16, 16>}, {transform_indices = @transform_1, window_bounds = array<i64: 8, 1>}, {transform_indices = @transform_2, window_bounds = array<i64: 8, 1>}, {transform_indices = @transform_3, window_bounds = array<i64: 1, 8, 16, 16>}]} {
    %c0 = arith.constant 0 : index
    %c0_0 = arith.constant 0 : index
    %c0_1 = arith.constant 0 : index
    %c0_2 = arith.constant 0 : index
    %0 = vector.load %arg3[%c0, %c0_0, %c0_1, %c0_2] : memref<1x1x16x16xf32, #tpu.memory_space<vmem>>, vector<1x1x16x16xf32>
    %1 = vector.shape_cast %0 : vector<1x1x16x16xf32> to vector<16x16xf32>
    %c0_3 = arith.constant 0 : index
    %c0_4 = arith.constant 0 : index
    %2 = vector.load %arg4[%c0_3, %c0_4] : memref<8x1xf32, #tpu.memory_space<vmem>>, vector<8x1xf32>
    %3 = vector.shape_cast %2 : vector<8x1xf32> to vector<8x1x1xf32>
    %c0_5 = arith.constant 0 : index
    %c0_6 = arith.constant 0 : index
    %4 = vector.load %arg5[%c0_5, %c0_6] : memref<8x1xf32, #tpu.memory_space<vmem>>, vector<8x1xf32>
    %5 = vector.shape_cast %4 : vector<8x1xf32> to vector<8x1x1xf32>
    %6 = vector.shape_cast %1 : vector<16x16xf32> to vector<1x16x16xf32>
    %7 = vector.broadcast %6 : vector<1x16x16xf32> to vector<8x16x16xf32>
    %8 = vector.broadcast %3 : vector<8x1x1xf32> to vector<8x16x16xf32>
    %9 = arith.mulf %7, %8 : vector<8x16x16xf32>
    %10 = vector.broadcast %5 : vector<8x1x1xf32> to vector<8x16x16xf32>
    %11 = arith.addf %9, %10 : vector<8x16x16xf32>
    %12 = math.sin %11 : vector<8x16x16xf32>
    %c0_7 = arith.constant 0 : index
    %c0_8 = arith.constant 0 : index
    %c0_9 = arith.constant 0 : index
    %c0_10 = arith.constant 0 : index
    %13 = vector.load %arg6[%c0_7, %c0_8, %c0_9, %c0_10] : memref<1x8x16x16xf32, #tpu.memory_space<vmem>>, vector<1x8x16x16xf32>
    %14 = vector.shape_cast %13 : vector<1x8x16x16xf32> to vector<8x16x16xf32>
    %15 = vector.shape_cast %12 : vector<8x16x16xf32> to vector<1x8x16x16xf32>
    tpu.vector_store %arg6[%c0_7, %c0_8, %c0_9, %c0_10], %15 {strides = array<i32>} : memref<1x8x16x16xf32, #tpu.memory_space<vmem>>, vector<1x8x16x16xf32>,
    return
  }
  func.func @transform_0(%arg0: i32, %arg1: i32, %arg2: i32) -> (i32, i32, i32, i32) {
    %c0_i32 = arith.constant 0 : i32
    %c0_i32_0 = arith.constant 0 : i32
    %c0_i32_1 = arith.constant 0 : i32
    return %arg0, %arg1, %c0_i32, %c0_i32_0 : i32, i32, i32, i32
  }
  func.func @transform_1(%arg0: i32, %arg1: i32, %arg2: i32) -> (i32, i32) {
    %c0_i32 = arith.constant 0 : i32
    %c0_i32_0 = arith.constant 0 : i32
    return %arg2, %c0_i32 : i32, i32
  }
  func.func @transform_2(%arg0: i32, %arg1: i32, %arg2: i32) -> (i32, i32) {
    %c0_i32 = arith.constant 0 : i32
    %c0_i32_0 = arith.constant 0 : i32
    return %arg2, %c0_i32 : i32, i32
  }
  func.func @transform_3(%arg0: i32, %arg1: i32, %arg2: i32) -> (i32, i32, i32, i32) {
    %c1_i32 = arith.constant 1 : i32
    %0 = arith.muli %arg1, %c1_i32 : i32
    %1 = arith.addi %0, %arg2 : i32
    %c0_i32 = arith.constant 0 : i32
    %c0_i32_0 = arith.constant 0 : i32
    %c0_i32_1 = arith.constant 0 : i32
    return %arg0, %1, %c0_i32, %c0_i32_0 : i32, i32, i32, i32
  }
}

</mosaic_0001>

<llo_original>
// kernel: tpu_custom_call.1
$region0: #{tpu_custom_call.1}
  #allocation0 [shape = 'u32[]', space=smem, size = 0x4, offset = 0x4, fixed_abs, tag = 'smem constant byte address 0x4 - core index']
  #allocation1 [shape = 'u32[144,128]{1,0:T(1,128)}', space=vmem, size = 0x12000, scoped, tag = 'internal scratch']
  %s0 = inlined_call_operand.hbm [shape: f32[2,2,16,16], index: 0, kind: input, shape index: {}]
  %s1 = inlined_call_operand.vmem [shape: f32[8,1], index: 1, kind: input, shape index: {}]
  %s2 = inlined_call_operand.vmem [shape: f32[8,1], index: 2, kind: input, shape index: {}]
  %s3 = inlined_call_operand.hbm [shape: f32[2,16,16,16], index: 3, kind: output, shape index: {}]
  %s4 = sld [smem:[#allocation0]]
  $region49: #{tpu_custom_call.1} parent=0
    _
  %s6 = ssub.s32 1, %s4
  %s7 = scalar_select 0, %s6, %s4
  $region1: #{tpu_custom_call.1} parent=0
    #allocation2 [shape = 'u8[16384]{0}', space=vmem, size = 0x4000, scoped, tag = 'input window, operand 0']
    #allocation3 [shape = 's32[2]{0}', space=sflag, size = 0x8, scoped, tag = 'scoped memory for tpu_custom_call.1']
    #allocation4 [shape = 's32[2]{0}', space=sflag, size = 0x8, scoped, tag = 'scoped memory for tpu_custom_call.1']
    #allocation5 [shape = 'u8[131072]{0}', space=vmem, size = 0x20000, scoped, tag = 'output window, operand 0']
    %8 = vsyncpa [#allocation3], 0
    %s9 = scalar_lea.sflag [#allocation3], 1
    %10 = vsyncpa %s9, 0
    %11 = vsyncpa [#allocation4], 0
    %s12 = scalar_lea.sflag [#allocation4], 1
    %13 = vsyncpa %s12, 0
    loop: start=0, step=1, limit=6
    $region2: #{tpu_custom_call.1} parent=1 // loop_pre_header
      _
    $region3: #{tpu_custom_call.1} parent=1 // loop_header
      %s15 = sphi 0, %s19
      %p16 = scmp.ge.s32.totalorder %s15, 6
      %s22 = sphi 0, %s41
      %s23 = sphi 0, %s37
      %s24 = sphi 0, %s33
      %s25 = sphi 0, %s22
      %s26 = sphi 0, %s23
      %s27 = sphi 0, %s24
      %s28 = sphi 0, %s25
      %s29 = sphi 0, %s26
      %s30 = sphi 0, %s27
      %s46 = sphi 0, %s48
      %s49 = sphi 0, %s46
      %s50 = sphi 0, %s49
      %s66 = sphi 0, %s50
      %s72 = sphi 0, %s74
      %s75 = sphi 0, %s72
      %s76 = sphi 0, %s75
      %s92 = sphi 0, %s76
      %s98 = sphi 0, %s100
      %s101 = sphi 0, %s98
      %s102 = sphi 0, %s101
      %s118 = sphi 0, %s102
      %s128 = sphi 0, %s130
      %s131 = sphi 0, %s128
      %s132 = sphi 0, %s131
      %s148 = sphi 0, %s132
    $region4: #{tpu_custom_call.1} parent=1 // loop_header_branch
      %18 = sbr.rel (%p16) target = $region8
    $region5: #{tpu_custom_call.1} parent=1 // loop_body
      %s20 = ssub.s32 %s15, 1
      %s21 = ssub.s32 %s15, 2
      %s31 = sadd.s32 1, %s24
      %p32 = scmp.ge.s32.totalorder %s31, 1
      %s33 = scalar_select %p32, 0, %s31
      %s34 = sadd.s32 1, %s23
      %s35 = scalar_select %p32, %s34, %s23
      %p36 = scmp.ge.s32.totalorder %s35, 2
      %s37 = scalar_select %p36, 0, %s35
      %s38 = sadd.s32 1, %s22
      %s39 = scalar_select %p36, %s38, %s22
      %p40 = scmp.ge.s32.totalorder %s39, 2
      %s41 = scalar_select %p40, 0, %s39
      %s42 = ssub.s32 %s22, %s41
      %s43 = ssub.s32 %s23, %s37
      %s44 = sor.u32 %s42, %s43
      %p45 = scmp.eq.s32.totalorder %s44, 0
      %s47 = sadd.s32 %s46, 1
      %s48 = scalar_select %p45, %s46, %s47
      %p51 = pneg %p45
      %p52 = scmp.eq.s32.totalorder %s15, 3
      %p53 = por %p51, %p52
      %p54 = scmp.ne.s32.totalorder %s46, %s49
      %p55 = scmp.eq.s32.totalorder %s15, 0
      %p56 = por %p54, %p55
      %p57 = scmp.ne.s32.totalorder %s46, %s49
      %p58 = scmp.eq.s32.totalorder %s20, 3
      %p59 = por %p57, %p58
      %p60 = scmp.ne.s32.totalorder %s49, %s50
      %p61 = scmp.eq.s32.totalorder %s20, 0
      %p62 = por %p60, %p61
      %p63 = scmp.ne.s32.totalorder %s49, %s50
      %p64 = scmp.eq.s32.totalorder %s21, 3
      %p65 = por %p63, %p64
      %p67 = scmp.ne.s32.totalorder %s50, %s66
      %p68 = scmp.eq.s32.totalorder %s21, 0
      %p69 = por %p67, %p68
      %s70 = ssub.s32 %s24, %s33
      %p71 = scmp.eq.s32.totalorder %s70, 0
      %s73 = sadd.s32 %s72, 1
      %s74 = scalar_select %p71, %s72, %s73
      %p77 = pneg %p71
      %p78 = scmp.eq.s32.totalorder %s15, 3
      %p79 = por %p77, %p78
      %p80 = scmp.ne.s32.totalorder %s72, %s75
      %p81 = scmp.eq.s32.totalorder %s15, 0
      %p82 = por %p80, %p81
      %p83 = scmp.ne.s32.totalorder %s72, %s75
      %p84 = scmp.eq.s32.totalorder %s20, 3
      %p85 = por %p83, %p84
      %p86 = scmp.ne.s32.totalorder %s75, %s76
      %p87 = scmp.eq.s32.totalorder %s20, 0
      %p88 = por %p86, %p87
      %p89 = scmp.ne.s32.totalorder %s75, %s76
      %p90 = scmp.eq.s32.totalorder %s21, 3
      %p91 = por %p89, %p90
      %p93 = scmp.ne.s32.totalorder %s76, %s92
      %p94 = scmp.eq.s32.totalorder %s21, 0
      %p95 = por %p93, %p94
      %s96 = ssub.s32 %s24, %s33
      %p97 = scmp.eq.s32.totalorder %s96, 0
      %s99 = sadd.s32 %s98, 1
      %s100 = scalar_select %p97, %s98, %s99
      %p103 = pneg %p97
      %p104 = scmp.eq.s32.totalorder %s15, 3
      %p105 = por %p103, %p104
      %p106 = scmp.ne.s32.totalorder %s98, %s101
      %p107 = scmp.eq.s32.totalorder %s15, 0
      %p108 = por %p106, %p107
      %p109 = scmp.ne.s32.totalorder %s98, %s101
      %p110 = scmp.eq.s32.totalorder %s20, 3
      %p111 = por %p109, %p110
      %p112 = scmp.ne.s32.totalorder %s101, %s102
      %p113 = scmp.eq.s32.totalorder %s20, 0
      %p114 = por %p112, %p113
      %p115 = scmp.ne.s32.totalorder %s101, %s102
      %p116 = scmp.eq.s32.totalorder %s21, 3
      %p117 = por %p115, %p116
      %p119 = scmp.ne.s32.totalorder %s102, %s118
      %p120 = scmp.eq.s32.totalorder %s21, 0
      %p121 = por %p119, %p120
      %s122 = sadd.s32 %s23, %s24
      %s123 = sadd.s32 %s37, %s33
      %s124 = ssub.s32 %s22, %s41
      %s125 = ssub.s32 %s122, %s123
      %s126 = sor.u32 %s124, %s125
      %p127 = scmp.eq.s32.totalorder %s126, 0
      %s129 = sadd.s32 %s128, 1
      %s130 = scalar_select %p127, %s128, %s129
      %p133 = pneg %p127
      %p134 = scmp.eq.s32.totalorder %s15, 3
      %p135 = por %p133, %p134
      %p136 = scmp.ne.s32.totalorder %s128, %s131
      %p137 = scmp.eq.s32.totalorder %s15, 0
      %p138 = por %p136, %p137
      %p139 = scmp.ne.s32.totalorder %s128, %s131
      %p140 = scmp.eq.s32.totalorder %s20, 3
      %p141 = por %p139, %p140
      %p142 = scmp.ne.s32.totalorder %s131, %s132
      %p143 = scmp.eq.s32.totalorder %s20, 0
      %p144 = por %p142, %p143
      %p145 = scmp.ne.s32.totalorder %s131, %s132
      %p146 = scmp.eq.s32.totalorder %s21, 3
      %p147 = por %p145, %p146
      %p149 = scmp.ne.s32.totalorder %s132, %s148
      %p150 = scmp.eq.s32.totalorder %s21, 0
      %p151 = por %p149, %p150
      %p152 = scmp.le.s32.totalorder 1, %s15
      %p153 = scmp.lt.s32.totalorder %s15, 5
      %p154 = pnand %p152, %p153
      %p155 = pneg %p154
      // Predicated region
      $region9: #{tpu_custom_call.1} parent=5 // pred_check
        _
      $region10: #{tpu_custom_call.1} parent=5 // pred_check_branch
        %157 = sbr.rel (%p154) target = $region12
      $region11: #{tpu_custom_call.1} parent=5 // pred_region
        %s158 = ssub.s32 %s15, 1
        // Predicated region
        $region13: #{tpu_custom_call.1} parent=11 // pred_check
          %p159 = pneg %p88
        $region14: #{tpu_custom_call.1} parent=11 // pred_check_branch
          %161 = sbr.rel (%p159) target = $region16
        $region15: #{tpu_custom_call.1} parent=11 // pred_region
          %p162 = scmp.lt.s32.totalorder %s27, 0
          %s163 = scalar_select %p162, %s27, 0
          %s164 = smul.addr %s163, 8
          %s165 = scalar_lea.vmem %s1, %s164
        $region16: #{tpu_custom_call.1} parent=11 // pred_fallthru
          _
        // Predicated region
        $region17: #{tpu_custom_call.1} parent=11 // pred_check
          %p166 = pneg %p114
        $region18: #{tpu_custom_call.1} parent=11 // pred_check_branch
          %168 = sbr.rel (%p166) target = $region20
        $region19: #{tpu_custom_call.1} parent=11 // pred_region
          %p169 = scmp.lt.s32.totalorder %s27, 0
          %s170 = scalar_select %p169, %s27, 0
          %s171 = smul.addr %s170, 8
          %s172 = scalar_lea.vmem %s2, %s171
        $region20: #{tpu_custom_call.1} parent=11 // pred_fallthru
          _
      $region12: #{tpu_custom_call.1} parent=5 // pred_fallthru
        _
      %p173 = scmp.lt.s32.totalorder %s15, 4
      // Predicated region
      $region21: #{tpu_custom_call.1} parent=5 // pred_check
        %p174 = pneg %p173
      $region22: #{tpu_custom_call.1} parent=5 // pred_check_branch
        %176 = sbr.rel (%p174) target = $region24
      $region23: #{tpu_custom_call.1} parent=5 // pred_region
        // Predicated region
        $region25: #{tpu_custom_call.1} parent=23 // pred_check
          %p177 = pneg %p56
        $region26: #{tpu_custom_call.1} parent=23 // pred_check_branch
          %179 = sbr.rel (%p177) target = $region28
        $region27: #{tpu_custom_call.1} parent=23 // pred_region
          %s180 = sand.u32 %s46, 1
          %s181 = scalar_lea.sflag [#allocation3], %s180
          %s182 = sand.u32 %s46, 1
          %s183 = smul.addr %s182, 16
          %s184 = scalar_lea.vmem [#allocation2], %s183
          %s186 = ssub.s32 256, 256
          %187 = vsyncadd %s181, %s186
          %s188 = smul.addr %s23, 2
          %s189 = smul.addr %s22, 4
          %s190 = sadd.s32 %s188, %s189
          %s191 = smul.addr %s190, 128
          %s192 = scalar_lea.hbm %s0, %s191
          %s193 = sshll.u32 %s184, 4
          %s194 = int_to_ptr.vmem [resolvable:$true] %s193
          %199 = dma.hbm_to_vmem [thread:$0]  %s192, 256, %s194, %s181, 128, 128, 8
        $region28: #{tpu_custom_call.1} parent=23 // pred_fallthru
          _
      $region24: #{tpu_custom_call.1} parent=5 // pred_fallthru
        _
      %p200 = scmp.le.s32.totalorder 1, %s15
      %p201 = scmp.lt.s32.totalorder %s15, 5
      %p202 = pnand %p200, %p201
      %p203 = pneg %p202
      // Predicated region
      $region29: #{tpu_custom_call.1} parent=5 // pred_check
        _
      $region30: #{tpu_custom_call.1} parent=5 // pred_check_branch
        %205 = sbr.rel (%p202) target = $region32
      $region31: #{tpu_custom_call.1} parent=5 // pred_region
        %s206 = ssub.s32 %s15, 1
        %s207 = sand.u32 %s49, 1
        %s208 = scalar_lea.sflag [#allocation3], %s207
        %s209 = sand.u32 %s49, 1
        %s210 = smul.addr %s209, 16
        %s211 = scalar_lea.vmem [#allocation2], %s210
        // Predicated region
        $region33: #{tpu_custom_call.1} parent=31 // pred_check
          %p212 = pneg %p62
        $region34: #{tpu_custom_call.1} parent=31 // pred_check_branch
          %214 = sbr.rel (%p212) target = $region36
        $region35: #{tpu_custom_call.1} parent=31 // pred_region
          %215 = dma.done %s208, 256
        $region36: #{tpu_custom_call.1} parent=31 // pred_fallthru
          _
        %s216 = sand.u32 %s49, 1
        %s217 = scalar_lea.sflag [#allocation3], %s216
        %s218 = sand.u32 %s49, 1
        %s219 = smul.addr %s218, 16
        %s220 = scalar_lea.vmem [#allocation2], %s219
        %p221 = pneg %p62
        %p222 = pneg %p59
        %p223 = scmp.lt.s32.totalorder %s27, 0
        %s224 = scalar_select %p223, %s27, 0
        %s225 = smul.addr %s224, 8
        %s226 = scalar_lea.vmem %s1, %s225
        %p227 = pneg %p88
        %p228 = pneg %p85
        %p229 = scmp.lt.s32.totalorder %s27, 0
        %s230 = scalar_select %p229, %s27, 0
        %s231 = smul.addr %s230, 8
        %s232 = scalar_lea.vmem %s2, %s231
        %p233 = pneg %p114
        %p234 = pneg %p111
        %p235 = pneg %p144
        %p236 = pneg %p141
        %s237 = sand.u32 %s131, 1
        %s238 = scalar_lea.sflag [#allocation4], %s237
        %s239 = sand.u32 %s131, 1
        %s240 = smul.addr %s239, 128
        %s241 = scalar_lea.vmem [#allocation5], %s240
        %p242 = scmp.lt.s32.totalorder %s27, 0
        %s243 = scalar_select %p242, %s27, 0
        %s244 = smul.addr %s243, 8
        %s245 = scalar_lea.vmem %s1, %s244
        %p246 = scmp.lt.s32.totalorder %s27, 0
        %s247 = scalar_select %p246, %s27, 0
        %s248 = smul.addr %s247, 8
        %s249 = scalar_lea.vmem %s2, %s248
        %s250 = sadd.s32 %s26, %s27
        %s251 = smul.u32 8, %s250
        %v252 = vld [vmem:[%s211] sm:$0xff]
        %v253 = vld [vmem:[%s211 + $0x8] sm:$0xff]
        %v254 = vld [vmem:[%s245] sm:$0xff]
        %v256 = vcombine.high %v254, %v254
        %v258 = vunpack.c.l.s4 1966171168
        %v259 = vunpack.c.0.s8 %v258
        %v260 = vlaneseq
        %v261 = vshrl.u32 %v260, 7
        %v262 = vsub.s32 %v259, %v261
        %v263 = vrot.slane %v254, %v262
        %v265 = vunpack.c.l.s4 1966171168
        %v266 = vunpack.c.0.s8 %v265
        %v267 = vlaneseq
        %v268 = vshrl.u32 %v267, 7
        %v269 = vsub.s32 %v266, %v268
        %v270 = vrot.slane %v256, %v269
        %v271 = vcombine.high %v263, %v263
        %v272 = vcombine.high %v270, %v270
        %v274 = vunpack.c.l.s4 1966171168
        %v275 = vunpack.c.0.s8 %v274
        %v276 = vlaneseq
        %v277 = vshrl.u32 %v276, 7
        %v278 = vsub.s32 %v275, %v277
        %v279 = vrot.slane %v263, %v278
        %v281 = vunpack.c.l.s4 1966171168
        %v282 = vunpack.c.0.s8 %v281
        %v283 = vlaneseq
        %v284 = vshrl.u32 %v283, 7
        %v285 = vsub.s32 %v282, %v284
        %v286 = vrot.slane %v270, %v285
        %v288 = vunpack.c.l.s4 1966171168
        %v289 = vunpack.c.0.s8 %v288
        %v290 = vlaneseq
        %v291 = vshrl.u32 %v290, 7
        %v292 = vsub.s32 %v289, %v291
        %v293 = vrot.slane %v271, %v292
        %v295 = vunpack.c.l.s4 1966171168
        %v296 = vunpack.c.0.s8 %v295
        %v297 = vlaneseq
        %v298 = vshrl.u32 %v297, 7
        %v299 = vsub.s32 %v296, %v298
        %v300 = vrot.slane %v272, %v299
        %v301 = vcombine.high %v279, %v279
        %v302 = vcombine.high %v286, %v286
        %v303 = vcombine.high %v293, %v293
        %v304 = vcombine.high %v300, %v300
        %v305 = vld [vmem:[%s249] sm:$0xff]
        %v307 = vcombine.high %v305, %v305
        %v309 = vunpack.c.l.s4 1966171168
        %v310 = vunpack.c.0.s8 %v309
        %v311 = vlaneseq
        %v312 = vshrl.u32 %v311, 7
        %v313 = vsub.s32 %v310, %v312
        %v314 = vrot.slane %v305, %v313
        %v316 = vunpack.c.l.s4 1966171168
        %v317 = vunpack.c.0.s8 %v316
        %v318 = vlaneseq
        %v319 = vshrl.u32 %v318, 7
        %v320 = vsub.s32 %v317, %v319
        %v321 = vrot.slane %v307, %v320
        %v322 = vcombine.high %v314, %v314
        %v323 = vcombine.high %v321, %v321
        %v325 = vunpack.c.l.s4 1966171168
        %v326 = vunpack.c.0.s8 %v325
        %v327 = vlaneseq
        %v328 = vshrl.u32 %v327, 7
        %v329 = vsub.s32 %v326, %v328
        %v330 = vrot.slane %v314, %v329
        %v332 = vunpack.c.l.s4 1966171168
        %v333 = vunpack.c.0.s8 %v332
        %v334 = vlaneseq
        %v335 = vshrl.u32 %v334, 7
        %v336 = vsub.s32 %v333, %v335
        %v337 = vrot.slane %v321, %v336
        %v339 = vunpack.c.l.s4 1966171168
        %v340 = vunpack.c.0.s8 %v339
        %v341 = vlaneseq
        %v342 = vshrl.u32 %v341, 7
        %v343 = vsub.s32 %v340, %v342
        %v344 = vrot.slane %v322, %v343
        %v346 = vunpack.c.l.s4 1966171168
        %v347 = vunpack.c.0.s8 %v346
        %v348 = vlaneseq
        %v349 = vshrl.u32 %v348, 7
        %v350 = vsub.s32 %v347, %v349
        %v351 = vrot.slane %v323, %v350
        %v352 = vcombine.high %v330, %v330
        %v353 = vcombine.high %v337, %v337
        %v354 = vcombine.high %v344, %v344
        %v355 = vcombine.high %v351, %v351
        %v356 = vlaneseq
        %v357 = vshrl.u32 %v356, 7
        %v358 = vsub.s32 0, %v357
        %v359 = vrot.slane %v279, %v358
        %v360 = vlaneseq
        %v361 = vshrl.u32 %v360, 7
        %v362 = vsub.s32 0, %v361
        %v363 = vrot.slane %v293, %v362
        %v364 = vlaneseq
        %v365 = vshrl.u32 %v364, 7
        %v366 = vsub.s32 0, %v365
        %v367 = vrot.slane %v301, %v366
        %v368 = vlaneseq
        %v369 = vshrl.u32 %v368, 7
        %v370 = vsub.s32 0, %v369
        %v371 = vrot.slane %v303, %v370
        %v372 = vlaneseq
        %v373 = vshrl.u32 %v372, 7
        %v374 = vsub.s32 0, %v373
        %v375 = vrot.slane %v286, %v374
        %v376 = vlaneseq
        %v377 = vshrl.u32 %v376, 7
        %v378 = vsub.s32 0, %v377
        %v379 = vrot.slane %v300, %v378
        %v380 = vlaneseq
        %v381 = vshrl.u32 %v380, 7
        %v382 = vsub.s32 0, %v381
        %v383 = vrot.slane %v302, %v382
        %v384 = vlaneseq
        %v385 = vshrl.u32 %v384, 7
        %v386 = vsub.s32 0, %v385
        %v387 = vrot.slane %v304, %v386
        %388 = vset.pattern.permute.xlu0 0
        %389 = vperm.xlu0 %388, %v359
        %v390 = vpop.permute.xlu0 %389
        %392 = vset.pattern.permute.xlu0 0
        %393 = vperm.xlu0 %392, %v363
        %v394 = vpop.permute.xlu0 %393
        %396 = vset.pattern.permute.xlu0 0
        %397 = vperm.xlu0 %396, %v367
        %v398 = vpop.permute.xlu0 %397
        %400 = vset.pattern.permute.xlu0 0
        %401 = vperm.xlu0 %400, %v371
        %v402 = vpop.permute.xlu0 %401
        %404 = vset.pattern.permute.xlu0 0
        %405 = vperm.xlu0 %404, %v375
        %v406 = vpop.permute.xlu0 %405
        %408 = vset.pattern.permute.xlu0 0
        %409 = vperm.xlu0 %408, %v379
        %v410 = vpop.permute.xlu0 %409
        %412 = vset.pattern.permute.xlu0 0
        %413 = vperm.xlu0 %412, %v383
        %v414 = vpop.permute.xlu0 %413
        %416 = vset.pattern.permute.xlu0 0
        %417 = vperm.xlu0 %416, %v387
        %v418 = vpop.permute.xlu0 %417
        %v420 = vmul.f32 %v252, %v390
        %v421 = vmul.f32 %v253, %v390
        %v422 = vmul.f32 %v252, %v394
        %v423 = vmul.f32 %v253, %v394
        %v424 = vmul.f32 %v252, %v398
        %v425 = vmul.f32 %v253, %v398
        %v426 = vmul.f32 %v252, %v402
        %v427 = vmul.f32 %v253, %v402
        %v428 = vmul.f32 %v252, %v406
        %v429 = vmul.f32 %v253, %v406
        %v430 = vmul.f32 %v252, %v410
        %v431 = vmul.f32 %v253, %v410
        %v432 = vmul.f32 %v252, %v414
        %v433 = vmul.f32 %v253, %v414
        %v434 = vmul.f32 %v252, %v418
        %v435 = vmul.f32 %v253, %v418
        %v436 = vlaneseq
        %v437 = vshrl.u32 %v436, 7
        %v438 = vsub.s32 0, %v437
        %v439 = vrot.slane %v330, %v438
        %v440 = vlaneseq
        %v441 = vshrl.u32 %v440, 7
        %v442 = vsub.s32 0, %v441
        %v443 = vrot.slane %v344, %v442
        %v444 = vlaneseq
        %v445 = vshrl.u32 %v444, 7
        %v446 = vsub.s32 0, %v445
        %v447 = vrot.slane %v352, %v446
        %v448 = vlaneseq
        %v449 = vshrl.u32 %v448, 7
        %v450 = vsub.s32 0, %v449
        %v451 = vrot.slane %v354, %v450
        %v452 = vlaneseq
        %v453 = vshrl.u32 %v452, 7
        %v454 = vsub.s32 0, %v453
        %v455 = vrot.slane %v337, %v454
        %v456 = vlaneseq
        %v457 = vshrl.u32 %v456, 7
        %v458 = vsub.s32 0, %v457
        %v459 = vrot.slane %v351, %v458
        %v460 = vlaneseq
        %v461 = vshrl.u32 %v460, 7
        %v462 = vsub.s32 0, %v461
        %v463 = vrot.slane %v353, %v462
        %v464 = vlaneseq
        %v465 = vshrl.u32 %v464, 7
        %v466 = vsub.s32 0, %v465
        %v467 = vrot.slane %v355, %v466
        %468 = vset.pattern.permute.xlu0 0
        %469 = vperm.xlu0 %468, %v439
        %v470 = vpop.permute.xlu0 %469
        %472 = vset.pattern.permute.xlu0 0
        %473 = vperm.xlu0 %472, %v443
        %v474 = vpop.permute.xlu0 %473
        %476 = vset.pattern.permute.xlu0 0
        %477 = vperm.xlu0 %476, %v447
        %v478 = vpop.permute.xlu0 %477
        %480 = vset.pattern.permute.xlu0 0
        %481 = vperm.xlu0 %480, %v451
        %v482 = vpop.permute.xlu0 %481
        %484 = vset.pattern.permute.xlu0 0
        %485 = vperm.xlu0 %484, %v455
        %v486 = vpop.permute.xlu0 %485
        %488 = vset.pattern.permute.xlu0 0
        %489 = vperm.xlu0 %488, %v459
        %v490 = vpop.permute.xlu0 %489
        %492 = vset.pattern.permute.xlu0 0
        %493 = vperm.xlu0 %492, %v463
        %v494 = vpop.permute.xlu0 %493
        %496 = vset.pattern.permute.xlu0 0
        %497 = vperm.xlu0 %496, %v467
        %v498 = vpop.permute.xlu0 %497
        %v500 = vadd.f32 %v420, %v470
        %v501 = vadd.f32 %v421, %v470
        %v502 = vadd.f32 %v422, %v474
        %v503 = vadd.f32 %v423, %v474
        %v504 = vadd.f32 %v424, %v478
        %v505 = vadd.f32 %v425, %v478
        %v506 = vadd.f32 %v426, %v482
        %v507 = vadd.f32 %v427, %v482
        %v508 = vadd.f32 %v428, %v486
        %v509 = vadd.f32 %v429, %v486
        %v510 = vadd.f32 %v430, %v490
        %v511 = vadd.f32 %v431, %v490
        %v512 = vadd.f32 %v432, %v494
        %v513 = vadd.f32 %v433, %v494
        %v514 = vadd.f32 %v434, %v498
        %v515 = vadd.f32 %v435, %v498
        %v516 = vand.u32 2147483647, %v500
        %vm517 = vcmp.le.f32.partialorder %v516, 0.7853982
        %vm518 = vcmp.lt.s32.totalorder %v500, 0
        %v519 = vand.u32 %v500, 2139095040
        %v520 = vshrl.u32 %v519, 23
        %v521 = vsub.s32 %v520, 127
        %v522 = vand.u32 2147483647, %v500
        %v523 = vand.u32 %v522, 8388607
        %v524 = vor.u32 %v523, 8388608
        %v525 = vsub.s32 0, %v524
        %v526 = vadd.s32 %v521, 1
        %vm527 = vcmp.gt.s32.totalorder %v526, 0
        %v528 = vsel %vm527, %v526, 0
        %v529 = vshrl.u32 %v528, 5
        %v530 = vand.u32 %v528, 31
        %v531 = vsub.s32 32, %v530
        %v532 = vshrl.u32 683565275, %v531
        %v533 = vshll.u32 683565275, %v530
        %v534 = vshrl.u32 2475754826, %v531
        %v535 = vor.u32 %v533, %v534
        %v536 = vshll.u32 2475754826, %v530
        %v537 = vshrl.u32 2131351028, %v531
        %v538 = vor.u32 %v536, %v537
        %v539 = vshll.u32 2131351028, %v530
        %v540 = vshrl.u32 2102212464, %v531
        %v541 = vor.u32 %v539, %v540
        %v542 = vshll.u32 2102212464, %v530
        %v543 = vshrl.u32 920167782, %v531
        %v544 = vor.u32 %v542, %v543
        %v545 = vshll.u32 920167782, %v530
        %v546 = vshrl.u32 1326507024, %v531
        %v547 = vor.u32 %v545, %v546
        %vm548 = vcmp.lt.s32.totalorder %v529, 1
        %vm549 = vcmp.lt.s32.totalorder %v529, 2
        %vm550 = vcmp.lt.s32.totalorder %v529, 3
        %vm551 = vcmp.lt.s32.totalorder %v529, 4
        %v552 = vsel %vm548, %v532, %v535
        %v553 = vsel %vm551, %v541, 2102212464
        %v554 = vsel %vm550, %v538, %v553
        %v555 = vsel %vm549, %v552, %v554
        %v556 = vsel %vm548, %v535, %v538
        %v557 = vsel %vm551, %v544, 920167782
        %v558 = vsel %vm550, %v541, %v557
        %v559 = vsel %vm549, %v556, %v558
        %v560 = vsel %vm548, %v538, %v541
        %v561 = vsel %vm551, %v547, 1326507024
        %v562 = vsel %vm550, %v544, %v561
        %v563 = vsel %vm549, %v560, %v562
        %v564 = vshll.u32 %v524, 8
        %v565 = vmul.u32.u64.compose %v564, %v563
        %v566 = vextract.low.u32 %v565
        %v567 = vextract.high.u32 %v565
        %v568 = vmul.u32.u64.compose %v564, %v559
        %v569 = vextract.low.u32 %v568
        %v570 = vextract.high.u32 %v568
        %v571 = vmul.u32 %v564, %v555
        %v572 = vadd.s32 %v567, %v569
        %vm573 = vc.u32 %v567, %v569
        %v574 = vadd.s32 %v570, 1
        %v575 = vsel %vm573, %v574, %v570
        %v576 = vadd.s32 %v571, %v575
        %v577 = vadd.s32 %v576, 536870912
        %v578 = vshrl.u32 %v577, 30
        %v579 = vshll.u32 %v578, 30
        %v580 = vsub.s32 %v576, %v579
        %vm581 = vcmp.lt.s32.totalorder %v580, 0
        %v582 = vsub.s32 0, %v580
        %v583 = vsel %vm581, %v582, %v580
        %v584 = vclz %v583
        %v585 = vsub.s32 %v584, 2
        %vm586 = vcmp.gt.s32.totalorder 0, %v585
        %v587 = vsel %vm586, 0, %v585
        %v588 = vsub.s32 32, %v587
        %v589 = vshll.u32 %v580, %v587
        %v590 = vshrl.u32 %v572, %v588
        %v591 = vor.u32 %v589, %v590
        %v592 = vsub.s32 4294967266, %v587
        %v593 = vadd.s32 %v592, 127
        %v594 = vshll.u32 %v593, 23
        %v595 = vor.u32 4788187, %v594
        %v596 = vand.u32 2147483647, %v595
        %v598 = vcvt.s32.f32 %v591
        %v599 = vmul.f32 %v598, %v596
        %v600 = vxor.u32 %v599, 2147483648
        %v601 = vsel %vm518, %v600, %v599
        %v602 = vsub.s32 4, %v578
        %v603 = vsel %vm518, %v602, %v578
        %v604 = vsel %vm517, %v500, %v601
        %v605 = vsel %vm517, 0, %v603
        %v606 = vcosq.f32.pop %v604
        %v607 = vsinq.f32.pop %v604
        %vm608 = vweird.f32 %v500
        %v609 = vadd.s32 %v605, 3
        %v610 = vand.u32 %v609, 3
        %vm611 = vcmp.lt.s32.totalorder %v610, 2
        %vm612 = vcmp.eq.s32.totalorder %v610, 0
        %v613 = vxor.u32 %v607, 2147483648
        %v614 = vsel %vm612, %v606, %v613
        %vm615 = vcmp.eq.s32.totalorder %v610, 2
        %v616 = vxor.u32 %v606, 2147483648
        %v617 = vsel %vm615, %v616, %v607
        %v618 = vsel %vm611, %v614, %v617
        %v619 = vsel %vm608, nan, %v618
        %v620 = vand.u32 2147483647, %v501
        %vm621 = vcmp.le.f32.partialorder %v620, 0.7853982
        %vm622 = vcmp.lt.s32.totalorder %v501, 0
        %v623 = vand.u32 %v501, 2139095040
        %v624 = vshrl.u32 %v623, 23
        %v625 = vsub.s32 %v624, 127
        %v626 = vand.u32 2147483647, %v501
        %v627 = vand.u32 %v626, 8388607
        %v628 = vor.u32 %v627, 8388608
        %v629 = vsub.s32 0, %v628
        %v630 = vadd.s32 %v625, 1
        %vm631 = vcmp.gt.s32.totalorder %v630, 0
        %v632 = vsel %vm631, %v630, 0
        %v633 = vshrl.u32 %v632, 5
        %v634 = vand.u32 %v632, 31
        %v635 = vsub.s32 32, %v634
        %v636 = vshrl.u32 683565275, %v635
        %v637 = vshll.u32 683565275, %v634
        %v638 = vshrl.u32 2475754826, %v635
        %v639 = vor.u32 %v637, %v638
        %v640 = vshll.u32 2475754826, %v634
        %v641 = vshrl.u32 2131351028, %v635
        %v642 = vor.u32 %v640, %v641
        %v643 = vshll.u32 2131351028, %v634
        %v644 = vshrl.u32 2102212464, %v635
        %v645 = vor.u32 %v643, %v644
        %v646 = vshll.u32 2102212464, %v634
        %v647 = vshrl.u32 920167782, %v635
        %v648 = vor.u32 %v646, %v647
        %v649 = vshll.u32 920167782, %v634
        %v650 = vshrl.u32 1326507024, %v635
        %v651 = vor.u32 %v649, %v650
        %vm652 = vcmp.lt.s32.totalorder %v633, 1
        %vm653 = vcmp.lt.s32.totalorder %v633, 2
        %vm654 = vcmp.lt.s32.totalorder %v633, 3
        %vm655 = vcmp.lt.s32.totalorder %v633, 4
        %v656 = vsel %vm652, %v636, %v639
        %v657 = vsel %vm655, %v645, 2102212464
        %v658 = vsel %vm654, %v642, %v657
        %v659 = vsel %vm653, %v656, %v658
        %v660 = vsel %vm652, %v639, %v642
        %v661 = vsel %vm655, %v648, 920167782
        %v662 = vsel %vm654, %v645, %v661
        %v663 = vsel %vm653, %v660, %v662
        %v664 = vsel %vm652, %v642, %v645
        %v665 = vsel %vm655, %v651, 1326507024
        %v666 = vsel %vm654, %v648, %v665
        %v667 = vsel %vm653, %v664, %v666
        %v668 = vshll.u32 %v628, 8
        %v669 = vmul.u32.u64.compose %v668, %v667
        %v670 = vextract.low.u32 %v669
        %v671 = vextract.high.u32 %v669
        %v672 = vmul.u32.u64.compose %v668, %v663
        %v673 = vextract.low.u32 %v672
        %v674 = vextract.high.u32 %v672
        %v675 = vmul.u32 %v668, %v659
        %v676 = vadd.s32 %v671, %v673
        %vm677 = vc.u32 %v671, %v673
        %v678 = vadd.s32 %v674, 1
        %v679 = vsel %vm677, %v678, %v674
        %v680 = vadd.s32 %v675, %v679
        %v681 = vadd.s32 %v680, 536870912
        %v682 = vshrl.u32 %v681, 30
        %v683 = vshll.u32 %v682, 30
        %v684 = vsub.s32 %v680, %v683
        %vm685 = vcmp.lt.s32.totalorder %v684, 0
        %v686 = vsub.s32 0, %v684
        %v687 = vsel %vm685, %v686, %v684
        %v688 = vclz %v687
        %v689 = vsub.s32 %v688, 2
        %vm690 = vcmp.gt.s32.totalorder 0, %v689
        %v691 = vsel %vm690, 0, %v689
        %v692 = vsub.s32 32, %v691
        %v693 = vshll.u32 %v684, %v691
        %v694 = vshrl.u32 %v676, %v692
        %v695 = vor.u32 %v693, %v694
        %v696 = vsub.s32 4294967266, %v691
        %v697 = vadd.s32 %v696, 127
        %v698 = vshll.u32 %v697, 23
        %v699 = vor.u32 4788187, %v698
        %v700 = vand.u32 2147483647, %v699
        %v702 = vcvt.s32.f32 %v695
        %v703 = vmul.f32 %v702, %v700
        %v704 = vxor.u32 %v703, 2147483648
        %v705 = vsel %vm622, %v704, %v703
        %v706 = vsub.s32 4, %v682
        %v707 = vsel %vm622, %v706, %v682
        %v708 = vsel %vm621, %v501, %v705
        %v709 = vsel %vm621, 0, %v707
        %v710 = vcosq.f32.pop %v708
        %v711 = vsinq.f32.pop %v708
        %vm712 = vweird.f32 %v501
        %v713 = vadd.s32 %v709, 3
        %v714 = vand.u32 %v713, 3
        %vm715 = vcmp.lt.s32.totalorder %v714, 2
        %vm716 = vcmp.eq.s32.totalorder %v714, 0
        %v717 = vxor.u32 %v711, 2147483648
        %v718 = vsel %vm716, %v710, %v717
        %vm719 = vcmp.eq.s32.totalorder %v714, 2
        %v720 = vxor.u32 %v710, 2147483648
        %v721 = vsel %vm719, %v720, %v711
        %v722 = vsel %vm715, %v718, %v721
        %v723 = vsel %vm712, nan, %v722
        %v724 = vand.u32 2147483647, %v502
        %vm725 = vcmp.le.f32.partialorder %v724, 0.7853982
        %vm726 = vcmp.lt.s32.totalorder %v502, 0
        %v727 = vand.u32 %v502, 2139095040
        %v728 = vshrl.u32 %v727, 23
        %v729 = vsub.s32 %v728, 127
        %v730 = vand.u32 2147483647, %v502
        %v731 = vand.u32 %v730, 8388607
        %v732 = vor.u32 %v731, 8388608
        %v733 = vsub.s32 0, %v732
        %v734 = vadd.s32 %v729, 1
        %vm735 = vcmp.gt.s32.totalorder %v734, 0
        %v736 = vsel %vm735, %v734, 0
        %v737 = vshrl.u32 %v736, 5
        %v738 = vand.u32 %v736, 31
        %v739 = vsub.s32 32, %v738
        %v740 = vshrl.u32 683565275, %v739
        %v741 = vshll.u32 683565275, %v738
        %v742 = vshrl.u32 2475754826, %v739
        %v743 = vor.u32 %v741, %v742
        %v744 = vshll.u32 2475754826, %v738
        %v745 = vshrl.u32 2131351028, %v739
        %v746 = vor.u32 %v744, %v745
        %v747 = vshll.u32 2131351028, %v738
        %v748 = vshrl.u32 2102212464, %v739
        %v749 = vor.u32 %v747, %v748
        %v750 = vshll.u32 2102212464, %v738
        %v751 = vshrl.u32 920167782, %v739
        %v752 = vor.u32 %v750, %v751
        %v753 = vshll.u32 920167782, %v738
        %v754 = vshrl.u32 1326507024, %v739
        %v755 = vor.u32 %v753, %v754
        %vm756 = vcmp.lt.s32.totalorder %v737, 1
        %vm757 = vcmp.lt.s32.totalorder %v737, 2
        %vm758 = vcmp.lt.s32.totalorder %v737, 3
        %vm759 = vcmp.lt.s32.totalorder %v737, 4
        %v760 = vsel %vm756, %v740, %v743
        %v761 = vsel %vm759, %v749, 2102212464
        %v762 = vsel %vm758, %v746, %v761
        %v763 = vsel %vm757, %v760, %v762
        %v764 = vsel %vm756, %v743, %v746
        %v765 = vsel %vm759, %v752, 920167782
        %v766 = vsel %vm758, %v749, %v765
        %v767 = vsel %vm757, %v764, %v766
        %v768 = vsel %vm756, %v746, %v749
        %v769 = vsel %vm759, %v755, 1326507024
        %v770 = vsel %vm758, %v752, %v769
        %v771 = vsel %vm757, %v768, %v770
        %v772 = vshll.u32 %v732, 8
        %v773 = vmul.u32.u64.compose %v772, %v771
        %v774 = vextract.low.u32 %v773
        %v775 = vextract.high.u32 %v773
        %v776 = vmul.u32.u64.compose %v772, %v767
        %v777 = vextract.low.u32 %v776
        %v778 = vextract.high.u32 %v776
        %v779 = vmul.u32 %v772, %v763
        %v780 = vadd.s32 %v775, %v777
        %vm781 = vc.u32 %v775, %v777
        %v782 = vadd.s32 %v778, 1
        %v783 = vsel %vm781, %v782, %v778
        %v784 = vadd.s32 %v779, %v783
        %v785 = vadd.s32 %v784, 536870912
        %v786 = vshrl.u32 %v785, 30
        %v787 = vshll.u32 %v786, 30
        %v788 = vsub.s32 %v784, %v787
        %vm789 = vcmp.lt.s32.totalorder %v788, 0
        %v790 = vsub.s32 0, %v788
        %v791 = vsel %vm789, %v790, %v788
        %v792 = vclz %v791
        %v793 = vsub.s32 %v792, 2
        %vm794 = vcmp.gt.s32.totalorder 0, %v793
        %v795 = vsel %vm794, 0, %v793
        %v796 = vsub.s32 32, %v795
        %v797 = vshll.u32 %v788, %v795
        %v798 = vshrl.u32 %v780, %v796
        %v799 = vor.u32 %v797, %v798
        %v800 = vsub.s32 4294967266, %v795
        %v801 = vadd.s32 %v800, 127
        %v802 = vshll.u32 %v801, 23
        %v803 = vor.u32 4788187, %v802
        %v804 = vand.u32 2147483647, %v803
        %v806 = vcvt.s32.f32 %v799
        %v807 = vmul.f32 %v806, %v804
        %v808 = vxor.u32 %v807, 2147483648
        %v809 = vsel %vm726, %v808, %v807
        %v810 = vsub.s32 4, %v786
        %v811 = vsel %vm726, %v810, %v786
        %v812 = vsel %vm725, %v502, %v809
        %v813 = vsel %vm725, 0, %v811
        %v814 = vcosq.f32.pop %v812
        %v815 = vsinq.f32.pop %v812
        %vm816 = vweird.f32 %v502
        %v817 = vadd.s32 %v813, 3
        %v818 = vand.u32 %v817, 3
        %vm819 = vcmp.lt.s32.totalorder %v818, 2
        %vm820 = vcmp.eq.s32.totalorder %v818, 0
        %v821 = vxor.u32 %v815, 2147483648
        %v822 = vsel %vm820, %v814, %v821
        %vm823 = vcmp.eq.s32.totalorder %v818, 2
        %v824 = vxor.u32 %v814, 2147483648
        %v825 = vsel %vm823, %v824, %v815
        %v826 = vsel %vm819, %v822, %v825
        %v827 = vsel %vm816, nan, %v826
        %v828 = vand.u32 2147483647, %v503
        %vm829 = vcmp.le.f32.partialorder %v828, 0.7853982
        %vm830 = vcmp.lt.s32.totalorder %v503, 0
        %v831 = vand.u32 %v503, 2139095040
        %v832 = vshrl.u32 %v831, 23
        %v833 = vsub.s32 %v832, 127
        %v834 = vand.u32 2147483647, %v503
        %v835 = vand.u32 %v834, 8388607
        %v836 = vor.u32 %v835, 8388608
        %v837 = vsub.s32 0, %v836
        %v838 = vadd.s32 %v833, 1
        %vm839 = vcmp.gt.s32.totalorder %v838, 0
        %v840 = vsel %vm839, %v838, 0
        %v841 = vshrl.u32 %v840, 5
        %v842 = vand.u32 %v840, 31
        %v843 = vsub.s32 32, %v842
        %v844 = vshrl.u32 683565275, %v843
        %v845 = vshll.u32 683565275, %v842
        %v846 = vshrl.u32 2475754826, %v843
        %v847 = vor.u32 %v845, %v846
        %v848 = vshll.u32 2475754826, %v842
        %v849 = vshrl.u32 2131351028, %v843
        %v850 = vor.u32 %v848, %v849
        %v851 = vshll.u32 2131351028, %v842
        %v852 = vshrl.u32 2102212464, %v843
        %v853 = vor.u32 %v851, %v852
        %v854 = vshll.u32 2102212464, %v842
        %v855 = vshrl.u32 920167782, %v843
        %v856 = vor.u32 %v854, %v855
        %v857 = vshll.u32 920167782, %v842
        %v858 = vshrl.u32 1326507024, %v843
        %v859 = vor.u32 %v857, %v858
        %vm860 = vcmp.lt.s32.totalorder %v841, 1
        %vm861 = vcmp.lt.s32.totalorder %v841, 2
        %vm862 = vcmp.lt.s32.totalorder %v841, 3
        %vm863 = vcmp.lt.s32.totalorder %v841, 4
        %v864 = vsel %vm860, %v844, %v847
        %v865 = vsel %vm863, %v853, 2102212464
        %v866 = vsel %vm862, %v850, %v865
        %v867 = vsel %vm861, %v864, %v866
        %v868 = vsel %vm860, %v847, %v850
        %v869 = vsel %vm863, %v856, 920167782
        %v870 = vsel %vm862, %v853, %v869
        %v871 = vsel %vm861, %v868, %v870
        %v872 = vsel %vm860, %v850, %v853
        %v873 = vsel %vm863, %v859, 1326507024
        %v874 = vsel %vm862, %v856, %v873
        %v875 = vsel %vm861, %v872, %v874
        %v876 = vshll.u32 %v836, 8
        %v877 = vmul.u32.u64.compose %v876, %v875
        %v878 = vextract.low.u32 %v877
        %v879 = vextract.high.u32 %v877
        %v880 = vmul.u32.u64.compose %v876, %v871
        %v881 = vextract.low.u32 %v880
        %v882 = vextract.high.u32 %v880
        %v883 = vmul.u32 %v876, %v867
        %v884 = vadd.s32 %v879, %v881
        %vm885 = vc.u32 %v879, %v881
        %v886 = vadd.s32 %v882, 1
        %v887 = vsel %vm885, %v886, %v882
        %v888 = vadd.s32 %v883, %v887
        %v889 = vadd.s32 %v888, 536870912
        %v890 = vshrl.u32 %v889, 30
        %v891 = vshll.u32 %v890, 30
        %v892 = vsub.s32 %v888, %v891
        %vm893 = vcmp.lt.s32.totalorder %v892, 0
        %v894 = vsub.s32 0, %v892
        %v895 = vsel %vm893, %v894, %v892
        %v896 = vclz %v895
        %v897 = vsub.s32 %v896, 2
        %vm898 = vcmp.gt.s32.totalorder 0, %v897
        %v899 = vsel %vm898, 0, %v897
        %v900 = vsub.s32 32, %v899
        %v901 = vshll.u32 %v892, %v899
        %v902 = vshrl.u32 %v884, %v900
        %v903 = vor.u32 %v901, %v902
        %v904 = vsub.s32 4294967266, %v899
        %v905 = vadd.s32 %v904, 127
        %v906 = vshll.u32 %v905, 23
        %v907 = vor.u32 4788187, %v906
        %v908 = vand.u32 2147483647, %v907
        %v910 = vcvt.s32.f32 %v903
        %v911 = vmul.f32 %v910, %v908
        %v912 = vxor.u32 %v911, 2147483648
        %v913 = vsel %vm830, %v912, %v911
        %v914 = vsub.s32 4, %v890
        %v915 = vsel %vm830, %v914, %v890
        %v916 = vsel %vm829, %v503, %v913
        %v917 = vsel %vm829, 0, %v915
        %v918 = vcosq.f32.pop %v916
        %v919 = vsinq.f32.pop %v916
        %vm920 = vweird.f32 %v503
        %v921 = vadd.s32 %v917, 3
        %v922 = vand.u32 %v921, 3
        %vm923 = vcmp.lt.s32.totalorder %v922, 2
        %vm924 = vcmp.eq.s32.totalorder %v922, 0
        %v925 = vxor.u32 %v919, 2147483648
        %v926 = vsel %vm924, %v918, %v925
        %vm927 = vcmp.eq.s32.totalorder %v922, 2
        %v928 = vxor.u32 %v918, 2147483648
        %v929 = vsel %vm927, %v928, %v919
        %v930 = vsel %vm923, %v926, %v929
        %v931 = vsel %vm920, nan, %v930
        %v932 = vand.u32 2147483647, %v504
        %vm933 = vcmp.le.f32.partialorder %v932, 0.7853982
        %vm934 = vcmp.lt.s32.totalorder %v504, 0
        %v935 = vand.u32 %v504, 2139095040
        %v936 = vshrl.u32 %v935, 23
        %v937 = vsub.s32 %v936, 127
        %v938 = vand.u32 2147483647, %v504
        %v939 = vand.u32 %v938, 8388607
        %v940 = vor.u32 %v939, 8388608
        %v941 = vsub.s32 0, %v940
        %v942 = vadd.s32 %v937, 1
        %vm943 = vcmp.gt.s32.totalorder %v942, 0
        %v944 = vsel %vm943, %v942, 0
        %v945 = vshrl.u32 %v944, 5
        %v946 = vand.u32 %v944, 31
        %v947 = vsub.s32 32, %v946
        %v948 = vshrl.u32 683565275, %v947
        %v949 = vshll.u32 683565275, %v946
        %v950 = vshrl.u32 2475754826, %v947
        %v951 = vor.u32 %v949, %v950
        %v952 = vshll.u32 2475754826, %v946
        %v953 = vshrl.u32 2131351028, %v947
        %v954 = vor.u32 %v952, %v953
        %v955 = vshll.u32 2131351028, %v946
        %v956 = vshrl.u32 2102212464, %v947
        %v957 = vor.u32 %v955, %v956
        %v958 = vshll.u32 2102212464, %v946
        %v959 = vshrl.u32 920167782, %v947
        %v960 = vor.u32 %v958, %v959
        %v961 = vshll.u32 920167782, %v946
        %v962 = vshrl.u32 1326507024, %v947
        %v963 = vor.u32 %v961, %v962
        %vm964 = vcmp.lt.s32.totalorder %v945, 1
        %vm965 = vcmp.lt.s32.totalorder %v945, 2
        %vm966 = vcmp.lt.s32.totalorder %v945, 3
        %vm967 = vcmp.lt.s32.totalorder %v945, 4
        %v968 = vsel %vm964, %v948, %v951
        %v969 = vsel %vm967, %v957, 2102212464
        %v970 = vsel %vm966, %v954, %v969
        %v971 = vsel %vm965, %v968, %v970
        %v972 = vsel %vm964, %v951, %v954
        %v973 = vsel %vm967, %v960, 920167782
        %v974 = vsel %vm966, %v957, %v973
        %v975 = vsel %vm965, %v972, %v974
        %v976 = vsel %vm964, %v954, %v957
        %v977 = vsel %vm967, %v963, 1326507024
        %v978 = vsel %vm966, %v960, %v977
        %v979 = vsel %vm965, %v976, %v978
        %v980 = vshll.u32 %v940, 8
        %v981 = vmul.u32.u64.compose %v980, %v979
        %v982 = vextract.low.u32 %v981
        %v983 = vextract.high.u32 %v981
        %v984 = vmul.u32.u64.compose %v980, %v975
        %v985 = vextract.low.u32 %v984
        %v986 = vextract.high.u32 %v984
        %v987 = vmul.u32 %v980, %v971
        %v988 = vadd.s32 %v983, %v985
        %vm989 = vc.u32 %v983, %v985
        %v990 = vadd.s32 %v986, 1
        %v991 = vsel %vm989, %v990, %v986
        %v992 = vadd.s32 %v987, %v991
        %v993 = vadd.s32 %v992, 536870912
        %v994 = vshrl.u32 %v993, 30
        %v995 = vshll.u32 %v994, 30
        %v996 = vsub.s32 %v992, %v995
        %vm997 = vcmp.lt.s32.totalorder %v996, 0
        %v998 = vsub.s32 0, %v996
        %v999 = vsel %vm997, %v998, %v996
        %v1000 = vclz %v999
        %v1001 = vsub.s32 %v1000, 2
        %vm1002 = vcmp.gt.s32.totalorder 0, %v1001
        %v1003 = vsel %vm1002, 0, %v1001
        %v1004 = vsub.s32 32, %v1003
        %v1005 = vshll.u32 %v996, %v1003
        %v1006 = vshrl.u32 %v988, %v1004
        %v1007 = vor.u32 %v1005, %v1006
        %v1008 = vsub.s32 4294967266, %v1003
        %v1009 = vadd.s32 %v1008, 127
        %v1010 = vshll.u32 %v1009, 23
        %v1011 = vor.u32 4788187, %v1010
        %v1012 = vand.u32 2147483647, %v1011
        %v1014 = vcvt.s32.f32 %v1007
        %v1015 = vmul.f32 %v1014, %v1012
        %v1016 = vxor.u32 %v1015, 2147483648
        %v1017 = vsel %vm934, %v1016, %v1015
        %v1018 = vsub.s32 4, %v994
        %v1019 = vsel %vm934, %v1018, %v994
        %v1020 = vsel %vm933, %v504, %v1017
        %v1021 = vsel %vm933, 0, %v1019
        %v1022 = vcosq.f32.pop %v1020
        %v1023 = vsinq.f32.pop %v1020
        %vm1024 = vweird.f32 %v504
        %v1025 = vadd.s32 %v1021, 3
        %v1026 = vand.u32 %v1025, 3
        %vm1027 = vcmp.lt.s32.totalorder %v1026, 2
        %vm1028 = vcmp.eq.s32.totalorder %v1026, 0
        %v1029 = vxor.u32 %v1023, 2147483648
        %v1030 = vsel %vm1028, %v1022, %v1029
        %vm1031 = vcmp.eq.s32.totalorder %v1026, 2
        %v1032 = vxor.u32 %v1022, 2147483648
        %v1033 = vsel %vm1031, %v1032, %v1023
        %v1034 = vsel %vm1027, %v1030, %v1033
        %v1035 = vsel %vm1024, nan, %v1034
        %v1036 = vand.u32 2147483647, %v505
        %vm1037 = vcmp.le.f32.partialorder %v1036, 0.7853982
        %vm1038 = vcmp.lt.s32.totalorder %v505, 0
        %v1039 = vand.u32 %v505, 2139095040
        %v1040 = vshrl.u32 %v1039, 23
        %v1041 = vsub.s32 %v1040, 127
        %v1042 = vand.u32 2147483647, %v505
        %v1043 = vand.u32 %v1042, 8388607
        %v1044 = vor.u32 %v1043, 8388608
        %v1045 = vsub.s32 0, %v1044
        %v1046 = vadd.s32 %v1041, 1
        %vm1047 = vcmp.gt.s32.totalorder %v1046, 0
        %v1048 = vsel %vm1047, %v1046, 0
        %v1049 = vshrl.u32 %v1048, 5
        %v1050 = vand.u32 %v1048, 31
        %v1051 = vsub.s32 32, %v1050
        %v1052 = vshrl.u32 683565275, %v1051
        %v1053 = vshll.u32 683565275, %v1050
        %v1054 = vshrl.u32 2475754826, %v1051
        %v1055 = vor.u32 %v1053, %v1054
        %v1056 = vshll.u32 2475754826, %v1050
        %v1057 = vshrl.u32 2131351028, %v1051
        %v1058 = vor.u32 %v1056, %v1057
        %v1059 = vshll.u32 2131351028, %v1050
        %v1060 = vshrl.u32 2102212464, %v1051
        %v1061 = vor.u32 %v1059, %v1060
        %v1062 = vshll.u32 2102212464, %v1050
        %v1063 = vshrl.u32 920167782, %v1051
        %v1064 = vor.u32 %v1062, %v1063
        %v1065 = vshll.u32 920167782, %v1050
        %v1066 = vshrl.u32 1326507024, %v1051
        %v1067 = vor.u32 %v1065, %v1066
        %vm1068 = vcmp.lt.s32.totalorder %v1049, 1
        %vm1069 = vcmp.lt.s32.totalorder %v1049, 2
        %vm1070 = vcmp.lt.s32.totalorder %v1049, 3
        %vm1071 = vcmp.lt.s32.totalorder %v1049, 4
        %v1072 = vsel %vm1068, %v1052, %v1055
        %v1073 = vsel %vm1071, %v1061, 2102212464
        %v1074 = vsel %vm1070, %v1058, %v1073
        %v1075 = vsel %vm1069, %v1072, %v1074
        %v1076 = vsel %vm1068, %v1055, %v1058
        %v1077 = vsel %vm1071, %v1064, 920167782
        %v1078 = vsel %vm1070, %v1061, %v1077
        %v1079 = vsel %vm1069, %v1076, %v1078
        %v1080 = vsel %vm1068, %v1058, %v1061
        %v1081 = vsel %vm1071, %v1067, 1326507024
        %v1082 = vsel %vm1070, %v1064, %v1081
        %v1083 = vsel %vm1069, %v1080, %v1082
        %v1084 = vshll.u32 %v1044, 8
        %v1085 = vmul.u32.u64.compose %v1084, %v1083
        %v1086 = vextract.low.u32 %v1085
        %v1087 = vextract.high.u32 %v1085
        %v1088 = vmul.u32.u64.compose %v1084, %v1079
        %v1089 = vextract.low.u32 %v1088
        %v1090 = vextract.high.u32 %v1088
        %v1091 = vmul.u32 %v1084, %v1075
        %v1092 = vadd.s32 %v1087, %v1089
        %vm1093 = vc.u32 %v1087, %v1089
        %v1094 = vadd.s32 %v1090, 1
        %v1095 = vsel %vm1093, %v1094, %v1090
        %v1096 = vadd.s32 %v1091, %v1095
        %v1097 = vadd.s32 %v1096, 536870912
        %v1098 = vshrl.u32 %v1097, 30
        %v1099 = vshll.u32 %v1098, 30
        %v1100 = vsub.s32 %v1096, %v1099
        %vm1101 = vcmp.lt.s32.totalorder %v1100, 0
        %v1102 = vsub.s32 0, %v1100
        %v1103 = vsel %vm1101, %v1102, %v1100
        %v1104 = vclz %v1103
        %v1105 = vsub.s32 %v1104, 2
        %vm1106 = vcmp.gt.s32.totalorder 0, %v1105
        %v1107 = vsel %vm1106, 0, %v1105
        %v1108 = vsub.s32 32, %v1107
        %v1109 = vshll.u32 %v1100, %v1107
        %v1110 = vshrl.u32 %v1092, %v1108
        %v1111 = vor.u32 %v1109, %v1110
        %v1112 = vsub.s32 4294967266, %v1107
        %v1113 = vadd.s32 %v1112, 127
        %v1114 = vshll.u32 %v1113, 23
        %v1115 = vor.u32 4788187, %v1114
        %v1116 = vand.u32 2147483647, %v1115
        %v1118 = vcvt.s32.f32 %v1111
        %v1119 = vmul.f32 %v1118, %v1116
        %v1120 = vxor.u32 %v1119, 2147483648
        %v1121 = vsel %vm1038, %v1120, %v1119
        %v1122 = vsub.s32 4, %v1098
        %v1123 = vsel %vm1038, %v1122, %v1098
        %v1124 = vsel %vm1037, %v505, %v1121
        %v1125 = vsel %vm1037, 0, %v1123
        %v1126 = vcosq.f32.pop %v1124
        %v1127 = vsinq.f32.pop %v1124
        %vm1128 = vweird.f32 %v505
        %v1129 = vadd.s32 %v1125, 3
        %v1130 = vand.u32 %v1129, 3
        %vm1131 = vcmp.lt.s32.totalorder %v1130, 2
        %vm1132 = vcmp.eq.s32.totalorder %v1130, 0
        %v1133 = vxor.u32 %v1127, 2147483648
        %v1134 = vsel %vm1132, %v1126, %v1133
        %vm1135 = vcmp.eq.s32.totalorder %v1130, 2
        %v1136 = vxor.u32 %v1126, 2147483648
        %v1137 = vsel %vm1135, %v1136, %v1127
        %v1138 = vsel %vm1131, %v1134, %v1137
        %v1139 = vsel %vm1128, nan, %v1138
        %v1140 = vand.u32 2147483647, %v506
        %vm1141 = vcmp.le.f32.partialorder %v1140, 0.7853982
        %vm1142 = vcmp.lt.s32.totalorder %v506, 0
        %v1143 = vand.u32 %v506, 2139095040
        %v1144 = vshrl.u32 %v1143, 23
        %v1145 = vsub.s32 %v1144, 127
        %v1146 = vand.u32 2147483647, %v506
        %v1147 = vand.u32 %v1146, 8388607
        %v1148 = vor.u32 %v1147, 8388608
        %v1149 = vsub.s32 0, %v1148
        %v1150 = vadd.s32 %v1145, 1
        %vm1151 = vcmp.gt.s32.totalorder %v1150, 0
        %v1152 = vsel %vm1151, %v1150, 0
        %v1153 = vshrl.u32 %v1152, 5
        %v1154 = vand.u32 %v1152, 31
        %v1155 = vsub.s32 32, %v1154
        %v1156 = vshrl.u32 683565275, %v1155
        %v1157 = vshll.u32 683565275, %v1154
        %v1158 = vshrl.u32 2475754826, %v1155
        %v1159 = vor.u32 %v1157, %v1158
        %v1160 = vshll.u32 2475754826, %v1154
        %v1161 = vshrl.u32 2131351028, %v1155
        %v1162 = vor.u32 %v1160, %v1161
        %v1163 = vshll.u32 2131351028, %v1154
        %v1164 = vshrl.u32 2102212464, %v1155
        %v1165 = vor.u32 %v1163, %v1164
        %v1166 = vshll.u32 2102212464, %v1154
        %v1167 = vshrl.u32 920167782, %v1155
        %v1168 = vor.u32 %v1166, %v1167
        %v1169 = vshll.u32 920167782, %v1154
        %v1170 = vshrl.u32 1326507024, %v1155
        %v1171 = vor.u32 %v1169, %v1170
        %vm1172 = vcmp.lt.s32.totalorder %v1153, 1
        %vm1173 = vcmp.lt.s32.totalorder %v1153, 2
        %vm1174 = vcmp.lt.s32.totalorder %v1153, 3
        %vm1175 = vcmp.lt.s32.totalorder %v1153, 4
        %v1176 = vsel %vm1172, %v1156, %v1159
        %v1177 = vsel %vm1175, %v1165, 2102212464
        %v1178 = vsel %vm1174, %v1162, %v1177
        %v1179 = vsel %vm1173, %v1176, %v1178
        %v1180 = vsel %vm1172, %v1159, %v1162
        %v1181 = vsel %vm1175, %v1168, 920167782
        %v1182 = vsel %vm1174, %v1165, %v1181
        %v1183 = vsel %vm1173, %v1180, %v1182
        %v1184 = vsel %vm1172, %v1162, %v1165
        %v1185 = vsel %vm1175, %v1171, 1326507024
        %v1186 = vsel %vm1174, %v1168, %v1185
        %v1187 = vsel %vm1173, %v1184, %v1186
        %v1188 = vshll.u32 %v1148, 8
        %v1189 = vmul.u32.u64.compose %v1188, %v1187
        %v1190 = vextract.low.u32 %v1189
        %v1191 = vextract.high.u32 %v1189
        %v1192 = vmul.u32.u64.compose %v1188, %v1183
        %v1193 = vextract.low.u32 %v1192
        %v1194 = vextract.high.u32 %v1192
        %v1195 = vmul.u32 %v1188, %v1179
        %v1196 = vadd.s32 %v1191, %v1193
        %vm1197 = vc.u32 %v1191, %v1193
        %v1198 = vadd.s32 %v1194, 1
        %v1199 = vsel %vm1197, %v1198, %v1194
        %v1200 = vadd.s32 %v1195, %v1199
        %v1201 = vadd.s32 %v1200, 536870912
        %v1202 = vshrl.u32 %v1201, 30
        %v1203 = vshll.u32 %v1202, 30
        %v1204 = vsub.s32 %v1200, %v1203
        %vm1205 = vcmp.lt.s32.totalorder %v1204, 0
        %v1206 = vsub.s32 0, %v1204
        %v1207 = vsel %vm1205, %v1206, %v1204
        %v1208 = vclz %v1207
        %v1209 = vsub.s32 %v1208, 2
        %vm1210 = vcmp.gt.s32.totalorder 0, %v1209
        %v1211 = vsel %vm1210, 0, %v1209
        %v1212 = vsub.s32 32, %v1211
        %v1213 = vshll.u32 %v1204, %v1211
        %v1214 = vshrl.u32 %v1196, %v1212
        %v1215 = vor.u32 %v1213, %v1214
        %v1216 = vsub.s32 4294967266, %v1211
        %v1217 = vadd.s32 %v1216, 127
        %v1218 = vshll.u32 %v1217, 23
        %v1219 = vor.u32 4788187, %v1218
        %v1220 = vand.u32 2147483647, %v1219
        %v1222 = vcvt.s32.f32 %v1215
        %v1223 = vmul.f32 %v1222, %v1220
        %v1224 = vxor.u32 %v1223, 2147483648
        %v1225 = vsel %vm1142, %v1224, %v1223
        %v1226 = vsub.s32 4, %v1202
        %v1227 = vsel %vm1142, %v1226, %v1202
        %v1228 = vsel %vm1141, %v506, %v1225
        %v1229 = vsel %vm1141, 0, %v1227
        %v1230 = vcosq.f32.pop %v1228
        %v1231 = vsinq.f32.pop %v1228
        %vm1232 = vweird.f32 %v506
        %v1233 = vadd.s32 %v1229, 3
        %v1234 = vand.u32 %v1233, 3
        %vm1235 = vcmp.lt.s32.totalorder %v1234, 2
        %vm1236 = vcmp.eq.s32.totalorder %v1234, 0
        %v1237 = vxor.u32 %v1231, 2147483648
        %v1238 = vsel %vm1236, %v1230, %v1237
        %vm1239 = vcmp.eq.s32.totalorder %v1234, 2
        %v1240 = vxor.u32 %v1230, 2147483648
        %v1241 = vsel %vm1239, %v1240, %v1231
        %v1242 = vsel %vm1235, %v1238, %v1241
        %v1243 = vsel %vm1232, nan, %v1242
        %v1244 = vand.u32 2147483647, %v507
        %vm1245 = vcmp.le.f32.partialorder %v1244, 0.7853982
        %vm1246 = vcmp.lt.s32.totalorder %v507, 0
        %v1247 = vand.u32 %v507, 2139095040
        %v1248 = vshrl.u32 %v1247, 23
        %v1249 = vsub.s32 %v1248, 127
        %v1250 = vand.u32 2147483647, %v507
        %v1251 = vand.u32 %v1250, 8388607
        %v1252 = vor.u32 %v1251, 8388608
        %v1253 = vsub.s32 0, %v1252
        %v1254 = vadd.s32 %v1249, 1
        %vm1255 = vcmp.gt.s32.totalorder %v1254, 0
        %v1256 = vsel %vm1255, %v1254, 0
        %v1257 = vshrl.u32 %v1256, 5
        %v1258 = vand.u32 %v1256, 31
        %v1259 = vsub.s32 32, %v1258
        %v1260 = vshrl.u32 683565275, %v1259
        %v1261 = vshll.u32 683565275, %v1258
        %v1262 = vshrl.u32 2475754826, %v1259
        %v1263 = vor.u32 %v1261, %v1262
        %v1264 = vshll.u32 2475754826, %v1258
        %v1265 = vshrl.u32 2131351028, %v1259
        %v1266 = vor.u32 %v1264, %v1265
        %v1267 = vshll.u32 2131351028, %v1258
        %v1268 = vshrl.u32 2102212464, %v1259
        %v1269 = vor.u32 %v1267, %v1268
        %v1270 = vshll.u32 2102212464, %v1258
        %v1271 = vshrl.u32 920167782, %v1259
        %v1272 = vor.u32 %v1270, %v1271
        %v1273 = vshll.u32 920167782, %v1258
        %v1274 = vshrl.u32 1326507024, %v1259
        %v1275 = vor.u32 %v1273, %v1274
        %vm1276 = vcmp.lt.s32.totalorder %v1257, 1
        %vm1277 = vcmp.lt.s32.totalorder %v1257, 2
        %vm1278 = vcmp.lt.s32.totalorder %v1257, 3
        %vm1279 = vcmp.lt.s32.totalorder %v1257, 4
        %v1280 = vsel %vm1276, %v1260, %v1263
        %v1281 = vsel %vm1279, %v1269, 2102212464
        %v1282 = vsel %vm1278, %v1266, %v1281
        %v1283 = vsel %vm1277, %v1280, %v1282
        %v1284 = vsel %vm1276, %v1263, %v1266
        %v1285 = vsel %vm1279, %v1272, 920167782
        %v1286 = vsel %vm1278, %v1269, %v1285
        %v1287 = vsel %vm1277, %v1284, %v1286
        %v1288 = vsel %vm1276, %v1266, %v1269
        %v1289 = vsel %vm1279, %v1275, 1326507024
        %v1290 = vsel %vm1278, %v1272, %v1289
        %v1291 = vsel %vm1277, %v1288, %v1290
        %v1292 = vshll.u32 %v1252, 8
        %v1293 = vmul.u32.u64.compose %v1292, %v1291
        %v1294 = vextract.low.u32 %v1293
        %v1295 = vextract.high.u32 %v1293
        %v1296 = vmul.u32.u64.compose %v1292, %v1287
        %v1297 = vextract.low.u32 %v1296
        %v1298 = vextract.high.u32 %v1296
        %v1299 = vmul.u32 %v1292, %v1283
        %v1300 = vadd.s32 %v1295, %v1297
        %vm1301 = vc.u32 %v1295, %v1297
        %v1302 = vadd.s32 %v1298, 1
        %v1303 = vsel %vm1301, %v1302, %v1298
        %v1304 = vadd.s32 %v1299, %v1303
        %v1305 = vadd.s32 %v1304, 536870912
        %v1306 = vshrl.u32 %v1305, 30
        %v1307 = vshll.u32 %v1306, 30
        %v1308 = vsub.s32 %v1304, %v1307
        %vm1309 = vcmp.lt.s32.totalorder %v1308, 0
        %v1310 = vsub.s32 0, %v1308
        %v1311 = vsel %vm1309, %v1310, %v1308
        %v1312 = vclz %v1311
        %v1313 = vsub.s32 %v1312, 2
        %vm1314 = vcmp.gt.s32.totalorder 0, %v1313
        %v1315 = vsel %vm1314, 0, %v1313
        %v1316 = vsub.s32 32, %v1315
        %v1317 = vshll.u32 %v1308, %v1315
        %v1318 = vshrl.u32 %v1300, %v1316
        %v1319 = vor.u32 %v1317, %v1318
        %v1320 = vsub.s32 4294967266, %v1315
        %v1321 = vadd.s32 %v1320, 127
        %v1322 = vshll.u32 %v1321, 23
        %v1323 = vor.u32 4788187, %v1322
        %v1324 = vand.u32 2147483647, %v1323
        %v1326 = vcvt.s32.f32 %v1319
        %v1327 = vmul.f32 %v1326, %v1324
        %v1328 = vxor.u32 %v1327, 2147483648
        %v1329 = vsel %vm1246, %v1328, %v1327
        %v1330 = vsub.s32 4, %v1306
        %v1331 = vsel %vm1246, %v1330, %v1306
        %v1332 = vsel %vm1245, %v507, %v1329
        %v1333 = vsel %vm1245, 0, %v1331
        %v1334 = vcosq.f32.pop %v1332
        %v1335 = vsinq.f32.pop %v1332
        %vm1336 = vweird.f32 %v507
        %v1337 = vadd.s32 %v1333, 3
        %v1338 = vand.u32 %v1337, 3
        %vm1339 = vcmp.lt.s32.totalorder %v1338, 2
        %vm1340 = vcmp.eq.s32.totalorder %v1338, 0
        %v1341 = vxor.u32 %v1335, 2147483648
        %v1342 = vsel %vm1340, %v1334, %v1341
        %vm1343 = vcmp.eq.s32.totalorder %v1338, 2
        %v1344 = vxor.u32 %v1334, 2147483648
        %v1345 = vsel %vm1343, %v1344, %v1335
        %v1346 = vsel %vm1339, %v1342, %v1345
        %v1347 = vsel %vm1336, nan, %v1346
        %v1348 = vand.u32 2147483647, %v508
        %vm1349 = vcmp.le.f32.partialorder %v1348, 0.7853982
        %vm1350 = vcmp.lt.s32.totalorder %v508, 0
        %v1351 = vand.u32 %v508, 2139095040
        %v1352 = vshrl.u32 %v1351, 23
        %v1353 = vsub.s32 %v1352, 127
        %v1354 = vand.u32 2147483647, %v508
        %v1355 = vand.u32 %v1354, 8388607
        %v1356 = vor.u32 %v1355, 8388608
        %v1357 = vsub.s32 0, %v1356
        %v1358 = vadd.s32 %v1353, 1
        %vm1359 = vcmp.gt.s32.totalorder %v1358, 0
        %v1360 = vsel %vm1359, %v1358, 0
        %v1361 = vshrl.u32 %v1360, 5
        %v1362 = vand.u32 %v1360, 31
        %v1363 = vsub.s32 32, %v1362
        %v1364 = vshrl.u32 683565275, %v1363
        %v1365 = vshll.u32 683565275, %v1362
        %v1366 = vshrl.u32 2475754826, %v1363
        %v1367 = vor.u32 %v1365, %v1366
        %v1368 = vshll.u32 2475754826, %v1362
        %v1369 = vshrl.u32 2131351028, %v1363
        %v1370 = vor.u32 %v1368, %v1369
        %v1371 = vshll.u32 2131351028, %v1362
        %v1372 = vshrl.u32 2102212464, %v1363
        %v1373 = vor.u32 %v1371, %v1372
        %v1374 = vshll.u32 2102212464, %v1362
        %v1375 = vshrl.u32 920167782, %v1363
        %v1376 = vor.u32 %v1374, %v1375
        %v1377 = vshll.u32 920167782, %v1362
        %v1378 = vshrl.u32 1326507024, %v1363
        %v1379 = vor.u32 %v1377, %v1378
        %vm1380 = vcmp.lt.s32.totalorder %v1361, 1
        %vm1381 = vcmp.lt.s32.totalorder %v1361, 2
        %vm1382 = vcmp.lt.s32.totalorder %v1361, 3
        %vm1383 = vcmp.lt.s32.totalorder %v1361, 4
        %v1384 = vsel %vm1380, %v1364, %v1367
        %v1385 = vsel %vm1383, %v1373, 2102212464
        %v1386 = vsel %vm1382, %v1370, %v1385
        %v1387 = vsel %vm1381, %v1384, %v1386
        %v1388 = vsel %vm1380, %v1367, %v1370
        %v1389 = vsel %vm1383, %v1376, 920167782
        %v1390 = vsel %vm1382, %v1373, %v1389
        %v1391 = vsel %vm1381, %v1388, %v1390
        %v1392 = vsel %vm1380, %v1370, %v1373
        %v1393 = vsel %vm1383, %v1379, 1326507024
        %v1394 = vsel %vm1382, %v1376, %v1393
        %v1395 = vsel %vm1381, %v1392, %v1394
        %v1396 = vshll.u32 %v1356, 8
        %v1397 = vmul.u32.u64.compose %v1396, %v1395
        %v1398 = vextract.low.u32 %v1397
        %v1399 = vextract.high.u32 %v1397
        %v1400 = vmul.u32.u64.compose %v1396, %v1391
        %v1401 = vextract.low.u32 %v1400
        %v1402 = vextract.high.u32 %v1400
        %v1403 = vmul.u32 %v1396, %v1387
        %v1404 = vadd.s32 %v1399, %v1401
        %vm1405 = vc.u32 %v1399, %v1401
        %v1406 = vadd.s32 %v1402, 1
        %v1407 = vsel %vm1405, %v1406, %v1402
        %v1408 = vadd.s32 %v1403, %v1407
        %v1409 = vadd.s32 %v1408, 536870912
        %v1410 = vshrl.u32 %v1409, 30
        %v1411 = vshll.u32 %v1410, 30
        %v1412 = vsub.s32 %v1408, %v1411
        %vm1413 = vcmp.lt.s32.totalorder %v1412, 0
        %v1414 = vsub.s32 0, %v1412
        %v1415 = vsel %vm1413, %v1414, %v1412
        %v1416 = vclz %v1415
        %v1417 = vsub.s32 %v1416, 2
        %vm1418 = vcmp.gt.s32.totalorder 0, %v1417
        %v1419 = vsel %vm1418, 0, %v1417
        %v1420 = vsub.s32 32, %v1419
        %v1421 = vshll.u32 %v1412, %v1419
        %v1422 = vshrl.u32 %v1404, %v1420
        %v1423 = vor.u32 %v1421, %v1422
        %v1424 = vsub.s32 4294967266, %v1419
        %v1425 = vadd.s32 %v1424, 127
        %v1426 = vshll.u32 %v1425, 23
        %v1427 = vor.u32 4788187, %v1426
        %v1428 = vand.u32 2147483647, %v1427
        %v1430 = vcvt.s32.f32 %v1423
        %v1431 = vmul.f32 %v1430, %v1428
        %v1432 = vxor.u32 %v1431, 2147483648
        %v1433 = vsel %vm1350, %v1432, %v1431
        %v1434 = vsub.s32 4, %v1410
        %v1435 = vsel %vm1350, %v1434, %v1410
        %v1436 = vsel %vm1349, %v508, %v1433
        %v1437 = vsel %vm1349, 0, %v1435
        %v1438 = vcosq.f32.pop %v1436
        %v1439 = vsinq.f32.pop %v1436
        %vm1440 = vweird.f32 %v508
        %v1441 = vadd.s32 %v1437, 3
        %v1442 = vand.u32 %v1441, 3
        %vm1443 = vcmp.lt.s32.totalorder %v1442, 2
        %vm1444 = vcmp.eq.s32.totalorder %v1442, 0
        %v1445 = vxor.u32 %v1439, 2147483648
        %v1446 = vsel %vm1444, %v1438, %v1445
        %vm1447 = vcmp.eq.s32.totalorder %v1442, 2
        %v1448 = vxor.u32 %v1438, 2147483648
        %v1449 = vsel %vm1447, %v1448, %v1439
        %v1450 = vsel %vm1443, %v1446, %v1449
        %v1451 = vsel %vm1440, nan, %v1450
        %v1452 = vand.u32 2147483647, %v509
        %vm1453 = vcmp.le.f32.partialorder %v1452, 0.7853982
        %vm1454 = vcmp.lt.s32.totalorder %v509, 0
        %v1455 = vand.u32 %v509, 2139095040
        %v1456 = vshrl.u32 %v1455, 23
        %v1457 = vsub.s32 %v1456, 127
        %v1458 = vand.u32 2147483647, %v509
        %v1459 = vand.u32 %v1458, 8388607
        %v1460 = vor.u32 %v1459, 8388608
        %v1461 = vsub.s32 0, %v1460
        %v1462 = vadd.s32 %v1457, 1
        %vm1463 = vcmp.gt.s32.totalorder %v1462, 0
        %v1464 = vsel %vm1463, %v1462, 0
        %v1465 = vshrl.u32 %v1464, 5
        %v1466 = vand.u32 %v1464, 31
        %v1467 = vsub.s32 32, %v1466
        %v1468 = vshrl.u32 683565275, %v1467
        %v1469 = vshll.u32 683565275, %v1466
        %v1470 = vshrl.u32 2475754826, %v1467
        %v1471 = vor.u32 %v1469, %v1470
        %v1472 = vshll.u32 2475754826, %v1466
        %v1473 = vshrl.u32 2131351028, %v1467
        %v1474 = vor.u32 %v1472, %v1473
        %v1475 = vshll.u32 2131351028, %v1466
        %v1476 = vshrl.u32 2102212464, %v1467
        %v1477 = vor.u32 %v1475, %v1476
        %v1478 = vshll.u32 2102212464, %v1466
        %v1479 = vshrl.u32 920167782, %v1467
        %v1480 = vor.u32 %v1478, %v1479
        %v1481 = vshll.u32 920167782, %v1466
        %v1482 = vshrl.u32 1326507024, %v1467
        %v1483 = vor.u32 %v1481, %v1482
        %vm1484 = vcmp.lt.s32.totalorder %v1465, 1
        %vm1485 = vcmp.lt.s32.totalorder %v1465, 2
        %vm1486 = vcmp.lt.s32.totalorder %v1465, 3
        %vm1487 = vcmp.lt.s32.totalorder %v1465, 4
        %v1488 = vsel %vm1484, %v1468, %v1471
        %v1489 = vsel %vm1487, %v1477, 2102212464
        %v1490 = vsel %vm1486, %v1474, %v1489
        %v1491 = vsel %vm1485, %v1488, %v1490
        %v1492 = vsel %vm1484, %v1471, %v1474
        %v1493 = vsel %vm1487, %v1480, 920167782
        %v1494 = vsel %vm1486, %v1477, %v1493
        %v1495 = vsel %vm1485, %v1492, %v1494
        %v1496 = vsel %vm1484, %v1474, %v1477
        %v1497 = vsel %vm1487, %v1483, 1326507024
        %v1498 = vsel %vm1486, %v1480, %v1497
        %v1499 = vsel %vm1485, %v1496, %v1498
        %v1500 = vshll.u32 %v1460, 8
        %v1501 = vmul.u32.u64.compose %v1500, %v1499
        %v1502 = vextract.low.u32 %v1501
        %v1503 = vextract.high.u32 %v1501
        %v1504 = vmul.u32.u64.compose %v1500, %v1495
        %v1505 = vextract.low.u32 %v1504
        %v1506 = vextract.high.u32 %v1504
        %v1507 = vmul.u32 %v1500, %v1491
        %v1508 = vadd.s32 %v1503, %v1505
        %vm1509 = vc.u32 %v1503, %v1505
        %v1510 = vadd.s32 %v1506, 1
        %v1511 = vsel %vm1509, %v1510, %v1506
        %v1512 = vadd.s32 %v1507, %v1511
        %v1513 = vadd.s32 %v1512, 536870912
        %v1514 = vshrl.u32 %v1513, 30
        %v1515 = vshll.u32 %v1514, 30
        %v1516 = vsub.s32 %v1512, %v1515
        %vm1517 = vcmp.lt.s32.totalorder %v1516, 0
        %v1518 = vsub.s32 0, %v1516
        %v1519 = vsel %vm1517, %v1518, %v1516
        %v1520 = vclz %v1519
        %v1521 = vsub.s32 %v1520, 2
        %vm1522 = vcmp.gt.s32.totalorder 0, %v1521
        %v1523 = vsel %vm1522, 0, %v1521
        %v1524 = vsub.s32 32, %v1523
        %v1525 = vshll.u32 %v1516, %v1523
        %v1526 = vshrl.u32 %v1508, %v1524
        %v1527 = vor.u32 %v1525, %v1526
        %v1528 = vsub.s32 4294967266, %v1523
        %v1529 = vadd.s32 %v1528, 127
        %v1530 = vshll.u32 %v1529, 23
        %v1531 = vor.u32 4788187, %v1530
        %v1532 = vand.u32 2147483647, %v1531
        %v1534 = vcvt.s32.f32 %v1527
        %v1535 = vmul.f32 %v1534, %v1532
        %v1536 = vxor.u32 %v1535, 2147483648
        %v1537 = vsel %vm1454, %v1536, %v1535
        %v1538 = vsub.s32 4, %v1514
        %v1539 = vsel %vm1454, %v1538, %v1514
        %v1540 = vsel %vm1453, %v509, %v1537
        %v1541 = vsel %vm1453, 0, %v1539
        %v1542 = vcosq.f32.pop %v1540
        %v1543 = vsinq.f32.pop %v1540
        %vm1544 = vweird.f32 %v509
        %v1545 = vadd.s32 %v1541, 3
        %v1546 = vand.u32 %v1545, 3
        %vm1547 = vcmp.lt.s32.totalorder %v1546, 2
        %vm1548 = vcmp.eq.s32.totalorder %v1546, 0
        %v1549 = vxor.u32 %v1543, 2147483648
        %v1550 = vsel %vm1548, %v1542, %v1549
        %vm1551 = vcmp.eq.s32.totalorder %v1546, 2
        %v1552 = vxor.u32 %v1542, 2147483648
        %v1553 = vsel %vm1551, %v1552, %v1543
        %v1554 = vsel %vm1547, %v1550, %v1553
        %v1555 = vsel %vm1544, nan, %v1554
        %v1556 = vand.u32 2147483647, %v510
        %vm1557 = vcmp.le.f32.partialorder %v1556, 0.7853982
        %vm1558 = vcmp.lt.s32.totalorder %v510, 0
        %v1559 = vand.u32 %v510, 2139095040
        %v1560 = vshrl.u32 %v1559, 23
        %v1561 = vsub.s32 %v1560, 127
        %v1562 = vand.u32 2147483647, %v510
        %v1563 = vand.u32 %v1562, 8388607
        %v1564 = vor.u32 %v1563, 8388608
        %v1565 = vsub.s32 0, %v1564
        %v1566 = vadd.s32 %v1561, 1
        %vm1567 = vcmp.gt.s32.totalorder %v1566, 0
        %v1568 = vsel %vm1567, %v1566, 0
        %v1569 = vshrl.u32 %v1568, 5
        %v1570 = vand.u32 %v1568, 31
        %v1571 = vsub.s32 32, %v1570
        %v1572 = vshrl.u32 683565275, %v1571
        %v1573 = vshll.u32 683565275, %v1570
        %v1574 = vshrl.u32 2475754826, %v1571
        %v1575 = vor.u32 %v1573, %v1574
        %v1576 = vshll.u32 2475754826, %v1570
        %v1577 = vshrl.u32 2131351028, %v1571
        %v1578 = vor.u32 %v1576, %v1577
        %v1579 = vshll.u32 2131351028, %v1570
        %v1580 = vshrl.u32 2102212464, %v1571
        %v1581 = vor.u32 %v1579, %v1580
        %v1582 = vshll.u32 2102212464, %v1570
        %v1583 = vshrl.u32 920167782, %v1571
        %v1584 = vor.u32 %v1582, %v1583
        %v1585 = vshll.u32 920167782, %v1570
        %v1586 = vshrl.u32 1326507024, %v1571
        %v1587 = vor.u32 %v1585, %v1586
        %vm1588 = vcmp.lt.s32.totalorder %v1569, 1
        %vm1589 = vcmp.lt.s32.totalorder %v1569, 2
        %vm1590 = vcmp.lt.s32.totalorder %v1569, 3
        %vm1591 = vcmp.lt.s32.totalorder %v1569, 4
        %v1592 = vsel %vm1588, %v1572, %v1575
        %v1593 = vsel %vm1591, %v1581, 2102212464
        %v1594 = vsel %vm1590, %v1578, %v1593
        %v1595 = vsel %vm1589, %v1592, %v1594
        %v1596 = vsel %vm1588, %v1575, %v1578
        %v1597 = vsel %vm1591, %v1584, 920167782
        %v1598 = vsel %vm1590, %v1581, %v1597
        %v1599 = vsel %vm1589, %v1596, %v1598
        %v1600 = vsel %vm1588, %v1578, %v1581
        %v1601 = vsel %vm1591, %v1587, 1326507024
        %v1602 = vsel %vm1590, %v1584, %v1601
        %v1603 = vsel %vm1589, %v1600, %v1602
        %v1604 = vshll.u32 %v1564, 8
        %v1605 = vmul.u32.u64.compose %v1604, %v1603
        %v1606 = vextract.low.u32 %v1605
        %v1607 = vextract.high.u32 %v1605
        %v1608 = vmul.u32.u64.compose %v1604, %v1599
        %v1609 = vextract.low.u32 %v1608
        %v1610 = vextract.high.u32 %v1608
        %v1611 = vmul.u32 %v1604, %v1595
        %v1612 = vadd.s32 %v1607, %v1609
        %vm1613 = vc.u32 %v1607, %v1609
        %v1614 = vadd.s32 %v1610, 1
        %v1615 = vsel %vm1613, %v1614, %v1610
        %v1616 = vadd.s32 %v1611, %v1615
        %v1617 = vadd.s32 %v1616, 536870912
        %v1618 = vshrl.u32 %v1617, 30
        %v1619 = vshll.u32 %v1618, 30
        %v1620 = vsub.s32 %v1616, %v1619
        %vm1621 = vcmp.lt.s32.totalorder %v1620, 0
        %v1622 = vsub.s32 0, %v1620
        %v1623 = vsel %vm1621, %v1622, %v1620
        %v1624 = vclz %v1623
        %v1625 = vsub.s32 %v1624, 2
        %vm1626 = vcmp.gt.s32.totalorder 0, %v1625
        %v1627 = vsel %vm1626, 0, %v1625
        %v1628 = vsub.s32 32, %v1627
        %v1629 = vshll.u32 %v1620, %v1627
        %v1630 = vshrl.u32 %v1612, %v1628
        %v1631 = vor.u32 %v1629, %v1630
        %v1632 = vsub.s32 4294967266, %v1627
        %v1633 = vadd.s32 %v1632, 127
        %v1634 = vshll.u32 %v1633, 23
        %v1635 = vor.u32 4788187, %v1634
        %v1636 = vand.u32 2147483647, %v1635
        %v1638 = vcvt.s32.f32 %v1631
        %v1639 = vmul.f32 %v1638, %v1636
        %v1640 = vxor.u32 %v1639, 2147483648
        %v1641 = vsel %vm1558, %v1640, %v1639
        %v1642 = vsub.s32 4, %v1618
        %v1643 = vsel %vm1558, %v1642, %v1618
        %v1644 = vsel %vm1557, %v510, %v1641
        %v1645 = vsel %vm1557, 0, %v1643
        %v1646 = vcosq.f32.pop %v1644
        %v1647 = vsinq.f32.pop %v1644
        %vm1648 = vweird.f32 %v510
        %v1649 = vadd.s32 %v1645, 3
        %v1650 = vand.u32 %v1649, 3
        %vm1651 = vcmp.lt.s32.totalorder %v1650, 2
        %vm1652 = vcmp.eq.s32.totalorder %v1650, 0
        %v1653 = vxor.u32 %v1647, 2147483648
        %v1654 = vsel %vm1652, %v1646, %v1653
        %vm1655 = vcmp.eq.s32.totalorder %v1650, 2
        %v1656 = vxor.u32 %v1646, 2147483648
        %v1657 = vsel %vm1655, %v1656, %v1647
        %v1658 = vsel %vm1651, %v1654, %v1657
        %v1659 = vsel %vm1648, nan, %v1658
        %v1660 = vand.u32 2147483647, %v511
        %vm1661 = vcmp.le.f32.partialorder %v1660, 0.7853982
        %vm1662 = vcmp.lt.s32.totalorder %v511, 0
        %v1663 = vand.u32 %v511, 2139095040
        %v1664 = vshrl.u32 %v1663, 23
        %v1665 = vsub.s32 %v1664, 127
        %v1666 = vand.u32 2147483647, %v511
        %v1667 = vand.u32 %v1666, 8388607
        %v1668 = vor.u32 %v1667, 8388608
        %v1669 = vsub.s32 0, %v1668
        %v1670 = vadd.s32 %v1665, 1
        %vm1671 = vcmp.gt.s32.totalorder %v1670, 0
        %v1672 = vsel %vm1671, %v1670, 0
        %v1673 = vshrl.u32 %v1672, 5
        %v1674 = vand.u32 %v1672, 31
        %v1675 = vsub.s32 32, %v1674
        %v1676 = vshrl.u32 683565275, %v1675
        %v1677 = vshll.u32 683565275, %v1674
        %v1678 = vshrl.u32 2475754826, %v1675
        %v1679 = vor.u32 %v1677, %v1678
        %v1680 = vshll.u32 2475754826, %v1674
        %v1681 = vshrl.u32 2131351028, %v1675
        %v1682 = vor.u32 %v1680, %v1681
        %v1683 = vshll.u32 2131351028, %v1674
        %v1684 = vshrl.u32 2102212464, %v1675
        %v1685 = vor.u32 %v1683, %v1684
        %v1686 = vshll.u32 2102212464, %v1674
        %v1687 = vshrl.u32 920167782, %v1675
        %v1688 = vor.u32 %v1686, %v1687
        %v1689 = vshll.u32 920167782, %v1674
        %v1690 = vshrl.u32 1326507024, %v1675
        %v1691 = vor.u32 %v1689, %v1690
        %vm1692 = vcmp.lt.s32.totalorder %v1673, 1
        %vm1693 = vcmp.lt.s32.totalorder %v1673, 2
        %vm1694 = vcmp.lt.s32.totalorder %v1673, 3
        %vm1695 = vcmp.lt.s32.totalorder %v1673, 4
        %v1696 = vsel %vm1692, %v1676, %v1679
        %v1697 = vsel %vm1695, %v1685, 2102212464
        %v1698 = vsel %vm1694, %v1682, %v1697
        %v1699 = vsel %vm1693, %v1696, %v1698
        %v1700 = vsel %vm1692, %v1679, %v1682
        %v1701 = vsel %vm1695, %v1688, 920167782
        %v1702 = vsel %vm1694, %v1685, %v1701
        %v1703 = vsel %vm1693, %v1700, %v1702
        %v1704 = vsel %vm1692, %v1682, %v1685
        %v1705 = vsel %vm1695, %v1691, 1326507024
        %v1706 = vsel %vm1694, %v1688, %v1705
        %v1707 = vsel %vm1693, %v1704, %v1706
        %v1708 = vshll.u32 %v1668, 8
        %v1709 = vmul.u32.u64.compose %v1708, %v1707
        %v1710 = vextract.low.u32 %v1709
        %v1711 = vextract.high.u32 %v1709
        %v1712 = vmul.u32.u64.compose %v1708, %v1703
        %v1713 = vextract.low.u32 %v1712
        %v1714 = vextract.high.u32 %v1712
        %v1715 = vmul.u32 %v1708, %v1699
        %v1716 = vadd.s32 %v1711, %v1713
        %vm1717 = vc.u32 %v1711, %v1713
        %v1718 = vadd.s32 %v1714, 1
        %v1719 = vsel %vm1717, %v1718, %v1714
        %v1720 = vadd.s32 %v1715, %v1719
        %v1721 = vadd.s32 %v1720, 536870912
        %v1722 = vshrl.u32 %v1721, 30
        %v1723 = vshll.u32 %v1722, 30
        %v1724 = vsub.s32 %v1720, %v1723
        %vm1725 = vcmp.lt.s32.totalorder %v1724, 0
        %v1726 = vsub.s32 0, %v1724
        %v1727 = vsel %vm1725, %v1726, %v1724
        %v1728 = vclz %v1727
        %v1729 = vsub.s32 %v1728, 2
        %vm1730 = vcmp.gt.s32.totalorder 0, %v1729
        %v1731 = vsel %vm1730, 0, %v1729
        %v1732 = vsub.s32 32, %v1731
        %v1733 = vshll.u32 %v1724, %v1731
        %v1734 = vshrl.u32 %v1716, %v1732
        %v1735 = vor.u32 %v1733, %v1734
        %v1736 = vsub.s32 4294967266, %v1731
        %v1737 = vadd.s32 %v1736, 127
        %v1738 = vshll.u32 %v1737, 23
        %v1739 = vor.u32 4788187, %v1738
        %v1740 = vand.u32 2147483647, %v1739
        %v1742 = vcvt.s32.f32 %v1735
        %v1743 = vmul.f32 %v1742, %v1740
        %v1744 = vxor.u32 %v1743, 2147483648
        %v1745 = vsel %vm1662, %v1744, %v1743
        %v1746 = vsub.s32 4, %v1722
        %v1747 = vsel %vm1662, %v1746, %v1722
        %v1748 = vsel %vm1661, %v511, %v1745
        %v1749 = vsel %vm1661, 0, %v1747
        %v1750 = vcosq.f32.pop %v1748
        %v1751 = vsinq.f32.pop %v1748
        %vm1752 = vweird.f32 %v511
        %v1753 = vadd.s32 %v1749, 3
        %v1754 = vand.u32 %v1753, 3
        %vm1755 = vcmp.lt.s32.totalorder %v1754, 2
        %vm1756 = vcmp.eq.s32.totalorder %v1754, 0
        %v1757 = vxor.u32 %v1751, 2147483648
        %v1758 = vsel %vm1756, %v1750, %v1757
        %vm1759 = vcmp.eq.s32.totalorder %v1754, 2
        %v1760 = vxor.u32 %v1750, 2147483648
        %v1761 = vsel %vm1759, %v1760, %v1751
        %v1762 = vsel %vm1755, %v1758, %v1761
        %v1763 = vsel %vm1752, nan, %v1762
        %v1764 = vand.u32 2147483647, %v512
        %vm1765 = vcmp.le.f32.partialorder %v1764, 0.7853982
        %vm1766 = vcmp.lt.s32.totalorder %v512, 0
        %v1767 = vand.u32 %v512, 2139095040
        %v1768 = vshrl.u32 %v1767, 23
        %v1769 = vsub.s32 %v1768, 127
        %v1770 = vand.u32 2147483647, %v512
        %v1771 = vand.u32 %v1770, 8388607
        %v1772 = vor.u32 %v1771, 8388608
        %v1773 = vsub.s32 0, %v1772
        %v1774 = vadd.s32 %v1769, 1
        %vm1775 = vcmp.gt.s32.totalorder %v1774, 0
        %v1776 = vsel %vm1775, %v1774, 0
        %v1777 = vshrl.u32 %v1776, 5
        %v1778 = vand.u32 %v1776, 31
        %v1779 = vsub.s32 32, %v1778
        %v1780 = vshrl.u32 683565275, %v1779
        %v1781 = vshll.u32 683565275, %v1778
        %v1782 = vshrl.u32 2475754826, %v1779
        %v1783 = vor.u32 %v1781, %v1782
        %v1784 = vshll.u32 2475754826, %v1778
        %v1785 = vshrl.u32 2131351028, %v1779
        %v1786 = vor.u32 %v1784, %v1785
        %v1787 = vshll.u32 2131351028, %v1778
        %v1788 = vshrl.u32 2102212464, %v1779
        %v1789 = vor.u32 %v1787, %v1788
        %v1790 = vshll.u32 2102212464, %v1778
        %v1791 = vshrl.u32 920167782, %v1779
        %v1792 = vor.u32 %v1790, %v1791
        %v1793 = vshll.u32 920167782, %v1778
        %v1794 = vshrl.u32 1326507024, %v1779
        %v1795 = vor.u32 %v1793, %v1794
        %vm1796 = vcmp.lt.s32.totalorder %v1777, 1
        %vm1797 = vcmp.lt.s32.totalorder %v1777, 2
        %vm1798 = vcmp.lt.s32.totalorder %v1777, 3
        %vm1799 = vcmp.lt.s32.totalorder %v1777, 4
        %v1800 = vsel %vm1796, %v1780, %v1783
        %v1801 = vsel %vm1799, %v1789, 2102212464
        %v1802 = vsel %vm1798, %v1786, %v1801
        %v1803 = vsel %vm1797, %v1800, %v1802
        %v1804 = vsel %vm1796, %v1783, %v1786
        %v1805 = vsel %vm1799, %v1792, 920167782
        %v1806 = vsel %vm1798, %v1789, %v1805
        %v1807 = vsel %vm1797, %v1804, %v1806
        %v1808 = vsel %vm1796, %v1786, %v1789
        %v1809 = vsel %vm1799, %v1795, 1326507024
        %v1810 = vsel %vm1798, %v1792, %v1809
        %v1811 = vsel %vm1797, %v1808, %v1810
        %v1812 = vshll.u32 %v1772, 8
        %v1813 = vmul.u32.u64.compose %v1812, %v1811
        %v1814 = vextract.low.u32 %v1813
        %v1815 = vextract.high.u32 %v1813
        %v1816 = vmul.u32.u64.compose %v1812, %v1807
        %v1817 = vextract.low.u32 %v1816
        %v1818 = vextract.high.u32 %v1816
        %v1819 = vmul.u32 %v1812, %v1803
        %v1820 = vadd.s32 %v1815, %v1817
        %vm1821 = vc.u32 %v1815, %v1817
        %v1822 = vadd.s32 %v1818, 1
        %v1823 = vsel %vm1821, %v1822, %v1818
        %v1824 = vadd.s32 %v1819, %v1823
        %v1825 = vadd.s32 %v1824, 536870912
        %v1826 = vshrl.u32 %v1825, 30
        %v1827 = vshll.u32 %v1826, 30
        %v1828 = vsub.s32 %v1824, %v1827
        %vm1829 = vcmp.lt.s32.totalorder %v1828, 0
        %v1830 = vsub.s32 0, %v1828
        %v1831 = vsel %vm1829, %v1830, %v1828
        %v1832 = vclz %v1831
        %v1833 = vsub.s32 %v1832, 2
        %vm1834 = vcmp.gt.s32.totalorder 0, %v1833
        %v1835 = vsel %vm1834, 0, %v1833
        %v1836 = vsub.s32 32, %v1835
        %v1837 = vshll.u32 %v1828, %v1835
        %v1838 = vshrl.u32 %v1820, %v1836
        %v1839 = vor.u32 %v1837, %v1838
        %v1840 = vsub.s32 4294967266, %v1835
        %v1841 = vadd.s32 %v1840, 127
        %v1842 = vshll.u32 %v1841, 23
        %v1843 = vor.u32 4788187, %v1842
        %v1844 = vand.u32 2147483647, %v1843
        %v1846 = vcvt.s32.f32 %v1839
        %v1847 = vmul.f32 %v1846, %v1844
        %v1848 = vxor.u32 %v1847, 2147483648
        %v1849 = vsel %vm1766, %v1848, %v1847
        %v1850 = vsub.s32 4, %v1826
        %v1851 = vsel %vm1766, %v1850, %v1826
        %v1852 = vsel %vm1765, %v512, %v1849
        %v1853 = vsel %vm1765, 0, %v1851
        %v1854 = vcosq.f32.pop %v1852
        %v1855 = vsinq.f32.pop %v1852
        %vm1856 = vweird.f32 %v512
        %v1857 = vadd.s32 %v1853, 3
        %v1858 = vand.u32 %v1857, 3
        %vm1859 = vcmp.lt.s32.totalorder %v1858, 2
        %vm1860 = vcmp.eq.s32.totalorder %v1858, 0
        %v1861 = vxor.u32 %v1855, 2147483648
        %v1862 = vsel %vm1860, %v1854, %v1861
        %vm1863 = vcmp.eq.s32.totalorder %v1858, 2
        %v1864 = vxor.u32 %v1854, 2147483648
        %v1865 = vsel %vm1863, %v1864, %v1855
        %v1866 = vsel %vm1859, %v1862, %v1865
        %v1867 = vsel %vm1856, nan, %v1866
        %v1868 = vand.u32 2147483647, %v513
        %vm1869 = vcmp.le.f32.partialorder %v1868, 0.7853982
        %vm1870 = vcmp.lt.s32.totalorder %v513, 0
        %v1871 = vand.u32 %v513, 2139095040
        %v1872 = vshrl.u32 %v1871, 23
        %v1873 = vsub.s32 %v1872, 127
        %v1874 = vand.u32 2147483647, %v513
        %v1875 = vand.u32 %v1874, 8388607
        %v1876 = vor.u32 %v1875, 8388608
        %v1877 = vsub.s32 0, %v1876
        %v1878 = vadd.s32 %v1873, 1
        %vm1879 = vcmp.gt.s32.totalorder %v1878, 0
        %v1880 = vsel %vm1879, %v1878, 0
        %v1881 = vshrl.u32 %v1880, 5
        %v1882 = vand.u32 %v1880, 31
        %v1883 = vsub.s32 32, %v1882
        %v1884 = vshrl.u32 683565275, %v1883
        %v1885 = vshll.u32 683565275, %v1882
        %v1886 = vshrl.u32 2475754826, %v1883
        %v1887 = vor.u32 %v1885, %v1886
        %v1888 = vshll.u32 2475754826, %v1882
        %v1889 = vshrl.u32 2131351028, %v1883
        %v1890 = vor.u32 %v1888, %v1889
        %v1891 = vshll.u32 2131351028, %v1882
        %v1892 = vshrl.u32 2102212464, %v1883
        %v1893 = vor.u32 %v1891, %v1892
        %v1894 = vshll.u32 2102212464, %v1882
        %v1895 = vshrl.u32 920167782, %v1883
        %v1896 = vor.u32 %v1894, %v1895
        %v1897 = vshll.u32 920167782, %v1882
        %v1898 = vshrl.u32 1326507024, %v1883
        %v1899 = vor.u32 %v1897, %v1898
        %vm1900 = vcmp.lt.s32.totalorder %v1881, 1
        %vm1901 = vcmp.lt.s32.totalorder %v1881, 2
        %vm1902 = vcmp.lt.s32.totalorder %v1881, 3
        %vm1903 = vcmp.lt.s32.totalorder %v1881, 4
        %v1904 = vsel %vm1900, %v1884, %v1887
        %v1905 = vsel %vm1903, %v1893, 2102212464
        %v1906 = vsel %vm1902, %v1890, %v1905
        %v1907 = vsel %vm1901, %v1904, %v1906
        %v1908 = vsel %vm1900, %v1887, %v1890
        %v1909 = vsel %vm1903, %v1896, 920167782
        %v1910 = vsel %vm1902, %v1893, %v1909
        %v1911 = vsel %vm1901, %v1908, %v1910
        %v1912 = vsel %vm1900, %v1890, %v1893
        %v1913 = vsel %vm1903, %v1899, 1326507024
        %v1914 = vsel %vm1902, %v1896, %v1913
        %v1915 = vsel %vm1901, %v1912, %v1914
        %v1916 = vshll.u32 %v1876, 8
        %v1917 = vmul.u32.u64.compose %v1916, %v1915
        %v1918 = vextract.low.u32 %v1917
        %v1919 = vextract.high.u32 %v1917
        %v1920 = vmul.u32.u64.compose %v1916, %v1911
        %v1921 = vextract.low.u32 %v1920
        %v1922 = vextract.high.u32 %v1920
        %v1923 = vmul.u32 %v1916, %v1907
        %v1924 = vadd.s32 %v1919, %v1921
        %vm1925 = vc.u32 %v1919, %v1921
        %v1926 = vadd.s32 %v1922, 1
        %v1927 = vsel %vm1925, %v1926, %v1922
        %v1928 = vadd.s32 %v1923, %v1927
        %v1929 = vadd.s32 %v1928, 536870912
        %v1930 = vshrl.u32 %v1929, 30
        %v1931 = vshll.u32 %v1930, 30
        %v1932 = vsub.s32 %v1928, %v1931
        %vm1933 = vcmp.lt.s32.totalorder %v1932, 0
        %v1934 = vsub.s32 0, %v1932
        %v1935 = vsel %vm1933, %v1934, %v1932
        %v1936 = vclz %v1935
        %v1937 = vsub.s32 %v1936, 2
        %vm1938 = vcmp.gt.s32.totalorder 0, %v1937
        %v1939 = vsel %vm1938, 0, %v1937
        %v1940 = vsub.s32 32, %v1939
        %v1941 = vshll.u32 %v1932, %v1939
        %v1942 = vshrl.u32 %v1924, %v1940
        %v1943 = vor.u32 %v1941, %v1942
        %v1944 = vsub.s32 4294967266, %v1939
        %v1945 = vadd.s32 %v1944, 127
        %v1946 = vshll.u32 %v1945, 23
        %v1947 = vor.u32 4788187, %v1946
        %v1948 = vand.u32 2147483647, %v1947
        %v1950 = vcvt.s32.f32 %v1943
        %v1951 = vmul.f32 %v1950, %v1948
        %v1952 = vxor.u32 %v1951, 2147483648
        %v1953 = vsel %vm1870, %v1952, %v1951
        %v1954 = vsub.s32 4, %v1930
        %v1955 = vsel %vm1870, %v1954, %v1930
        %v1956 = vsel %vm1869, %v513, %v1953
        %v1957 = vsel %vm1869, 0, %v1955
        %v1958 = vcosq.f32.pop %v1956
        %v1959 = vsinq.f32.pop %v1956
        %vm1960 = vweird.f32 %v513
        %v1961 = vadd.s32 %v1957, 3
        %v1962 = vand.u32 %v1961, 3
        %vm1963 = vcmp.lt.s32.totalorder %v1962, 2
        %vm1964 = vcmp.eq.s32.totalorder %v1962, 0
        %v1965 = vxor.u32 %v1959, 2147483648
        %v1966 = vsel %vm1964, %v1958, %v1965
        %vm1967 = vcmp.eq.s32.totalorder %v1962, 2
        %v1968 = vxor.u32 %v1958, 2147483648
        %v1969 = vsel %vm1967, %v1968, %v1959
        %v1970 = vsel %vm1963, %v1966, %v1969
        %v1971 = vsel %vm1960, nan, %v1970
        %v1972 = vand.u32 2147483647, %v514
        %vm1973 = vcmp.le.f32.partialorder %v1972, 0.7853982
        %vm1974 = vcmp.lt.s32.totalorder %v514, 0
        %v1975 = vand.u32 %v514, 2139095040
        %v1976 = vshrl.u32 %v1975, 23
        %v1977 = vsub.s32 %v1976, 127
        %v1978 = vand.u32 2147483647, %v514
        %v1979 = vand.u32 %v1978, 8388607
        %v1980 = vor.u32 %v1979, 8388608
        %v1981 = vsub.s32 0, %v1980
        %v1982 = vadd.s32 %v1977, 1
        %vm1983 = vcmp.gt.s32.totalorder %v1982, 0
        %v1984 = vsel %vm1983, %v1982, 0
        %v1985 = vshrl.u32 %v1984, 5
        %v1986 = vand.u32 %v1984, 31
        %v1987 = vsub.s32 32, %v1986
        %v1988 = vshrl.u32 683565275, %v1987
        %v1989 = vshll.u32 683565275, %v1986
        %v1990 = vshrl.u32 2475754826, %v1987
        %v1991 = vor.u32 %v1989, %v1990
        %v1992 = vshll.u32 2475754826, %v1986
        %v1993 = vshrl.u32 2131351028, %v1987
        %v1994 = vor.u32 %v1992, %v1993
        %v1995 = vshll.u32 2131351028, %v1986
        %v1996 = vshrl.u32 2102212464, %v1987
        %v1997 = vor.u32 %v1995, %v1996
        %v1998 = vshll.u32 2102212464, %v1986
        %v1999 = vshrl.u32 920167782, %v1987
        %v2000 = vor.u32 %v1998, %v1999
        %v2001 = vshll.u32 920167782, %v1986
        %v2002 = vshrl.u32 1326507024, %v1987
        %v2003 = vor.u32 %v2001, %v2002
        %vm2004 = vcmp.lt.s32.totalorder %v1985, 1
        %vm2005 = vcmp.lt.s32.totalorder %v1985, 2
        %vm2006 = vcmp.lt.s32.totalorder %v1985, 3
        %vm2007 = vcmp.lt.s32.totalorder %v1985, 4
        %v2008 = vsel %vm2004, %v1988, %v1991
        %v2009 = vsel %vm2007, %v1997, 2102212464
        %v2010 = vsel %vm2006, %v1994, %v2009
        %v2011 = vsel %vm2005, %v2008, %v2010
        %v2012 = vsel %vm2004, %v1991, %v1994
        %v2013 = vsel %vm2007, %v2000, 920167782
        %v2014 = vsel %vm2006, %v1997, %v2013
        %v2015 = vsel %vm2005, %v2012, %v2014
        %v2016 = vsel %vm2004, %v1994, %v1997
        %v2017 = vsel %vm2007, %v2003, 1326507024
        %v2018 = vsel %vm2006, %v2000, %v2017
        %v2019 = vsel %vm2005, %v2016, %v2018
        %v2020 = vshll.u32 %v1980, 8
        %v2021 = vmul.u32.u64.compose %v2020, %v2019
        %v2022 = vextract.low.u32 %v2021
        %v2023 = vextract.high.u32 %v2021
        %v2024 = vmul.u32.u64.compose %v2020, %v2015
        %v2025 = vextract.low.u32 %v2024
        %v2026 = vextract.high.u32 %v2024
        %v2027 = vmul.u32 %v2020, %v2011
        %v2028 = vadd.s32 %v2023, %v2025
        %vm2029 = vc.u32 %v2023, %v2025
        %v2030 = vadd.s32 %v2026, 1
        %v2031 = vsel %vm2029, %v2030, %v2026
        %v2032 = vadd.s32 %v2027, %v2031
        %v2033 = vadd.s32 %v2032, 536870912
        %v2034 = vshrl.u32 %v2033, 30
        %v2035 = vshll.u32 %v2034, 30
        %v2036 = vsub.s32 %v2032, %v2035
        %vm2037 = vcmp.lt.s32.totalorder %v2036, 0
        %v2038 = vsub.s32 0, %v2036
        %v2039 = vsel %vm2037, %v2038, %v2036
        %v2040 = vclz %v2039
        %v2041 = vsub.s32 %v2040, 2
        %vm2042 = vcmp.gt.s32.totalorder 0, %v2041
        %v2043 = vsel %vm2042, 0, %v2041
        %v2044 = vsub.s32 32, %v2043
        %v2045 = vshll.u32 %v2036, %v2043
        %v2046 = vshrl.u32 %v2028, %v2044
        %v2047 = vor.u32 %v2045, %v2046
        %v2048 = vsub.s32 4294967266, %v2043
        %v2049 = vadd.s32 %v2048, 127
        %v2050 = vshll.u32 %v2049, 23
        %v2051 = vor.u32 4788187, %v2050
        %v2052 = vand.u32 2147483647, %v2051
        %v2054 = vcvt.s32.f32 %v2047
        %v2055 = vmul.f32 %v2054, %v2052
        %v2056 = vxor.u32 %v2055, 2147483648
        %v2057 = vsel %vm1974, %v2056, %v2055
        %v2058 = vsub.s32 4, %v2034
        %v2059 = vsel %vm1974, %v2058, %v2034
        %v2060 = vsel %vm1973, %v514, %v2057
        %v2061 = vsel %vm1973, 0, %v2059
        %v2062 = vcosq.f32.pop %v2060
        %v2063 = vsinq.f32.pop %v2060
        %vm2064 = vweird.f32 %v514
        %v2065 = vadd.s32 %v2061, 3
        %v2066 = vand.u32 %v2065, 3
        %vm2067 = vcmp.lt.s32.totalorder %v2066, 2
        %vm2068 = vcmp.eq.s32.totalorder %v2066, 0
        %v2069 = vxor.u32 %v2063, 2147483648
        %v2070 = vsel %vm2068, %v2062, %v2069
        %vm2071 = vcmp.eq.s32.totalorder %v2066, 2
        %v2072 = vxor.u32 %v2062, 2147483648
        %v2073 = vsel %vm2071, %v2072, %v2063
        %v2074 = vsel %vm2067, %v2070, %v2073
        %v2075 = vsel %vm2064, nan, %v2074
        %v2076 = vand.u32 2147483647, %v515
        %vm2077 = vcmp.le.f32.partialorder %v2076, 0.7853982
        %vm2078 = vcmp.lt.s32.totalorder %v515, 0
        %v2079 = vand.u32 %v515, 2139095040
        %v2080 = vshrl.u32 %v2079, 23
        %v2081 = vsub.s32 %v2080, 127
        %v2082 = vand.u32 2147483647, %v515
        %v2083 = vand.u32 %v2082, 8388607
        %v2084 = vor.u32 %v2083, 8388608
        %v2085 = vsub.s32 0, %v2084
        %v2086 = vadd.s32 %v2081, 1
        %vm2087 = vcmp.gt.s32.totalorder %v2086, 0
        %v2088 = vsel %vm2087, %v2086, 0
        %v2089 = vshrl.u32 %v2088, 5
        %v2090 = vand.u32 %v2088, 31
        %v2091 = vsub.s32 32, %v2090
        %v2092 = vshrl.u32 683565275, %v2091
        %v2093 = vshll.u32 683565275, %v2090
        %v2094 = vshrl.u32 2475754826, %v2091
        %v2095 = vor.u32 %v2093, %v2094
        %v2096 = vshll.u32 2475754826, %v2090
        %v2097 = vshrl.u32 2131351028, %v2091
        %v2098 = vor.u32 %v2096, %v2097
        %v2099 = vshll.u32 2131351028, %v2090
        %v2100 = vshrl.u32 2102212464, %v2091
        %v2101 = vor.u32 %v2099, %v2100
        %v2102 = vshll.u32 2102212464, %v2090
        %v2103 = vshrl.u32 920167782, %v2091
        %v2104 = vor.u32 %v2102, %v2103
        %v2105 = vshll.u32 920167782, %v2090
        %v2106 = vshrl.u32 1326507024, %v2091
        %v2107 = vor.u32 %v2105, %v2106
        %vm2108 = vcmp.lt.s32.totalorder %v2089, 1
        %vm2109 = vcmp.lt.s32.totalorder %v2089, 2
        %vm2110 = vcmp.lt.s32.totalorder %v2089, 3
        %vm2111 = vcmp.lt.s32.totalorder %v2089, 4
        %v2112 = vsel %vm2108, %v2092, %v2095
        %v2113 = vsel %vm2111, %v2101, 2102212464
        %v2114 = vsel %vm2110, %v2098, %v2113
        %v2115 = vsel %vm2109, %v2112, %v2114
        %v2116 = vsel %vm2108, %v2095, %v2098
        %v2117 = vsel %vm2111, %v2104, 920167782
        %v2118 = vsel %vm2110, %v2101, %v2117
        %v2119 = vsel %vm2109, %v2116, %v2118
        %v2120 = vsel %vm2108, %v2098, %v2101
        %v2121 = vsel %vm2111, %v2107, 1326507024
        %v2122 = vsel %vm2110, %v2104, %v2121
        %v2123 = vsel %vm2109, %v2120, %v2122
        %v2124 = vshll.u32 %v2084, 8
        %v2125 = vmul.u32.u64.compose %v2124, %v2123
        %v2126 = vextract.low.u32 %v2125
        %v2127 = vextract.high.u32 %v2125
        %v2128 = vmul.u32.u64.compose %v2124, %v2119
        %v2129 = vextract.low.u32 %v2128
        %v2130 = vextract.high.u32 %v2128
        %v2131 = vmul.u32 %v2124, %v2115
        %v2132 = vadd.s32 %v2127, %v2129
        %vm2133 = vc.u32 %v2127, %v2129
        %v2134 = vadd.s32 %v2130, 1
        %v2135 = vsel %vm2133, %v2134, %v2130
        %v2136 = vadd.s32 %v2131, %v2135
        %v2137 = vadd.s32 %v2136, 536870912
        %v2138 = vshrl.u32 %v2137, 30
        %v2139 = vshll.u32 %v2138, 30
        %v2140 = vsub.s32 %v2136, %v2139
        %vm2141 = vcmp.lt.s32.totalorder %v2140, 0
        %v2142 = vsub.s32 0, %v2140
        %v2143 = vsel %vm2141, %v2142, %v2140
        %v2144 = vclz %v2143
        %v2145 = vsub.s32 %v2144, 2
        %vm2146 = vcmp.gt.s32.totalorder 0, %v2145
        %v2147 = vsel %vm2146, 0, %v2145
        %v2148 = vsub.s32 32, %v2147
        %v2149 = vshll.u32 %v2140, %v2147
        %v2150 = vshrl.u32 %v2132, %v2148
        %v2151 = vor.u32 %v2149, %v2150
        %v2152 = vsub.s32 4294967266, %v2147
        %v2153 = vadd.s32 %v2152, 127
        %v2154 = vshll.u32 %v2153, 23
        %v2155 = vor.u32 4788187, %v2154
        %v2156 = vand.u32 2147483647, %v2155
        %v2158 = vcvt.s32.f32 %v2151
        %v2159 = vmul.f32 %v2158, %v2156
        %v2160 = vxor.u32 %v2159, 2147483648
        %v2161 = vsel %vm2078, %v2160, %v2159
        %v2162 = vsub.s32 4, %v2138
        %v2163 = vsel %vm2078, %v2162, %v2138
        %v2164 = vsel %vm2077, %v515, %v2161
        %v2165 = vsel %vm2077, 0, %v2163
        %v2166 = vcosq.f32.pop %v2164
        %v2167 = vsinq.f32.pop %v2164
        %vm2168 = vweird.f32 %v515
        %v2169 = vadd.s32 %v2165, 3
        %v2170 = vand.u32 %v2169, 3
        %vm2171 = vcmp.lt.s32.totalorder %v2170, 2
        %vm2172 = vcmp.eq.s32.totalorder %v2170, 0
        %v2173 = vxor.u32 %v2167, 2147483648
        %v2174 = vsel %vm2172, %v2166, %v2173
        %vm2175 = vcmp.eq.s32.totalorder %v2170, 2
        %v2176 = vxor.u32 %v2166, 2147483648
        %v2177 = vsel %vm2175, %v2176, %v2167
        %v2178 = vsel %vm2171, %v2174, %v2177
        %v2179 = vsel %vm2168, nan, %v2178
        %vm2180 = vcmask 130048
        %2181 = vst.msk [vmem:[%s241] sm:$0xff] %vm2180, %v619
        %2182 = vst.msk [vmem:[%s241 + $0x8] sm:$0xff] %vm2180, %v723
        %2183 = vst.msk [vmem:[%s241 + $0x10] sm:$0xff] %vm2180, %v827
        %2184 = vst.msk [vmem:[%s241 + $0x18] sm:$0xff] %vm2180, %v931
        %2185 = vst.msk [vmem:[%s241 + $0x20] sm:$0xff] %vm2180, %v1035
        %2186 = vst.msk [vmem:[%s241 + $0x28] sm:$0xff] %vm2180, %v1139
        %2187 = vst.msk [vmem:[%s241 + $0x30] sm:$0xff] %vm2180, %v1243
        %2188 = vst.msk [vmem:[%s241 + $0x38] sm:$0xff] %vm2180, %v1347
        %2189 = vst.msk [vmem:[%s241 + $0x40] sm:$0xff] %vm2180, %v1451
        %2190 = vst.msk [vmem:[%s241 + $0x48] sm:$0xff] %vm2180, %v1555
        %2191 = vst.msk [vmem:[%s241 + $0x50] sm:$0xff] %vm2180, %v1659
        %2192 = vst.msk [vmem:[%s241 + $0x58] sm:$0xff] %vm2180, %v1763
        %2193 = vst.msk [vmem:[%s241 + $0x60] sm:$0xff] %vm2180, %v1867
        %2194 = vst.msk [vmem:[%s241 + $0x68] sm:$0xff] %vm2180, %v1971
        %2195 = vst.msk [vmem:[%s241 + $0x70] sm:$0xff] %vm2180, %v2075
        %2196 = vst.msk [vmem:[%s241 + $0x78] sm:$0xff] %vm2180, %v2179
        %s2197 = sand.u32 %s131, 1
        %s2198 = scalar_lea.sflag [#allocation4], %s2197
        %s2199 = sand.u32 %s131, 1
        %s2200 = smul.addr %s2199, 128
        %s2201 = scalar_lea.vmem [#allocation5], %s2200
        // Predicated region
        $region37: #{tpu_custom_call.1} parent=31 // pred_check
          %p2202 = pneg %p141
        $region38: #{tpu_custom_call.1} parent=31 // pred_check_branch
          %2204 = sbr.rel (%p2202) target = $region40
        $region39: #{tpu_custom_call.1} parent=31 // pred_region
          %s2205 = sadd.s32 %s26, %s27
          %s2206 = smul.u32 8, %s2205
          %s2208 = ssub.s32 2048, 2048
          %2209 = vsyncadd %s2198, %s2208
          %s2210 = smul.addr %s2206, 2
          %s2211 = smul.addr %s25, 32
          %s2212 = sadd.s32 %s2210, %s2211
          %s2213 = smul.addr %s2212, 128
          %s2214 = scalar_lea.hbm %s3, %s2213
          %s2215 = sshll.u32 %s2201, 4
          %s2216 = int_to_ptr.vmem [resolvable:$true] %s2215
          %2221 = dma.vmem_to_hbm [thread:$0]  %s2216, 2048, %s2214, %s2198, 128, 128, 8
        $region40: #{tpu_custom_call.1} parent=31 // pred_fallthru
          _
      $region32: #{tpu_custom_call.1} parent=5 // pred_fallthru
        _
      %p2222 = scmp.le.s32.totalorder 2, %s15
      // Predicated region
      $region41: #{tpu_custom_call.1} parent=5 // pred_check
        %p2223 = pneg %p2222
      $region42: #{tpu_custom_call.1} parent=5 // pred_check_branch
        %2225 = sbr.rel (%p2223) target = $region44
      $region43: #{tpu_custom_call.1} parent=5 // pred_region
        %s2226 = ssub.s32 %s15, 2
        // Predicated region
        $region45: #{tpu_custom_call.1} parent=43 // pred_check
          %p2227 = pneg %p147
        $region46: #{tpu_custom_call.1} parent=43 // pred_check_branch
          %2229 = sbr.rel (%p2227) target = $region48
        $region47: #{tpu_custom_call.1} parent=43 // pred_region
          %s2230 = sand.u32 %s132, 1
          %s2231 = scalar_lea.sflag [#allocation4], %s2230
          %s2232 = sand.u32 %s132, 1
          %s2233 = smul.addr %s2232, 128
          %s2234 = scalar_lea.vmem [#allocation5], %s2233
          %2235 = dma.done %s2231, 2048
        $region48: #{tpu_custom_call.1} parent=43 // pred_fallthru
          _
      $region44: #{tpu_custom_call.1} parent=5 // pred_fallthru
        _
    $region6: #{tpu_custom_call.1} parent=1 // loop_footer
      %s19 = sadd.s32 1, %s15
    $region7: #{tpu_custom_call.1} parent=1 // loop_footer_branch
      %14 = sbr.rel target = $region3
    $region8: #{tpu_custom_call.1} parent=1 // loop_exit
      _
    %2236 = vsyncpa [#allocation3], 1
    %s2237 = scalar_lea.sflag [#allocation3], 1
    %2238 = vsyncpa %s2237, 1
    %2239 = vsyncpa [#allocation4], 1
    %s2240 = scalar_lea.sflag [#allocation4], 1
    %2241 = vsyncpa %s2240, 1

</llo_original>
